<compile_context>
chip_gen: v7x
topology: tpu7x:2x2x1
jax: 0.10.0
libtpu: 0.0.40
codegen_flags: <defaults>
</compile_context>

<pallas_src>
import functools

import jax
import jax.numpy as jnp
from jax.experimental import pallas as pl
from jax.experimental.pallas import tpu as pltpu


# --------------------------------------------------------------------------
# model configuration (small stand-in for bert-base-uncased)
# --------------------------------------------------------------------------
CFG = dict(
    vocab_size=50,
    max_pos=16,
    type_vocab=2,
    hidden=32,
    n_layers=2,
    n_heads=4,
    intermediate=64,
    n_tgt_vocab=16,
)


# --------------------------------------------------------------------------
# kernel helpers
# --------------------------------------------------------------------------
def _layernorm(h, g, b, eps):
    mu = jnp.mean(h, axis=-1, keepdims=True)
    var = jnp.mean(jnp.square(h - mu), axis=-1, keepdims=True)
    return (h - mu) * jax.lax.rsqrt(var + eps) * g + b


def _gelu(y):
    # TODO(synk): tanh-approx GELU (EUP tanh) instead of BERT's exact erf GELU.
    c = jnp.float32(0.7978845608028654)  # sqrt(2/pi)
    return 0.5 * y * (1.0 + jnp.tanh(c * (y + 0.044715 * y * y * y)))


# --------------------------------------------------------------------------
# the single fused kernel: embeddings + L encoder layers + classifier head
# --------------------------------------------------------------------------
def _bert_kernel(
    # fixed inputs (resident across the layer grid axis)
    idx_ref, mask_ref, tok_emb_ref, pos_type_ref, emb_ln_ref,
    wfc_ref, wout_ref, head_b_ref,
    # per-layer (stacked) inputs
    wqkv_ref, wo_ref, wi_ref, wf_ref, vec_ref,
    # output + scratch
    o_ref, x_sc,
    *, batch, seq, n_heads, head_dim, hidden, inter, vocab, eps,
):
    layer = pl.program_id(0)
    B, S, nH, Dh, H, I = batch, seq, n_heads, head_dim, hidden, inter
    M = B * S

    # ---------------- layer 0: embeddings + embedding LayerNorm ----------------
    @pl.when(layer == 0)
    def _():
        # token embedding lookup as a one-hot selection matmul (vocab is tiny)
        col = jax.lax.broadcasted_iota(jnp.int32, (M, vocab), 1)
        onehot = (col == idx_ref[...]).astype(jnp.float32)          # (M, vocab)
        tok = jnp.dot(onehot, tok_emb_ref[...],
                      preferred_element_type=jnp.float32)           # (M, H)
        pos_type = jnp.broadcast_to(pos_type_ref[...][None], (B, S, H))
        emb = tok + pos_type.reshape(M, H)
        x_sc[...] = _layernorm(emb, emb_ln_ref[0:1, :], emb_ln_ref[1:2, :], eps)
    # TODO(synk): dropout (p=0.1) omitted -- inference (eval-mode) semantics.
    # TODO(synk): token_type_ids hard-coded to 0 (default BERT usage).

    x = x_sc[...]                                   # (M, H) f32 residual stream
    x_bf = x.astype(jnp.bfloat16)

    # coalesced per-layer small-vector slab (1 DMA instead of ~8)
    bqkv  = vec_ref[0:1, 0:3 * H]
    bo    = vec_ref[1:2, 0:H]
    ln1_g = vec_ref[2:3, 0:H]
    ln1_b = vec_ref[3:4, 0:H]
    bi    = vec_ref[4:5, 0:I]
    bf_b  = vec_ref[5:6, 0:H]
    ln2_g = vec_ref[6:7, 0:H]
    ln2_b = vec_ref[7:8, 0:H]

    # ----------------------------- self-attention ------------------------------
    qkv = jnp.dot(x_bf, wqkv_ref[...], preferred_element_type=jnp.float32)
    qkv = qkv + bqkv                                # (M, 3H) f32
    qkv3 = qkv.reshape(B, S, 3 * H)

    # stack heads into one batch dim: (nH*B, S, Dh), batch index = h*B + b
    def stack_heads(base):
        parts = [qkv3[:, :, base + h * Dh: base + (h + 1) * Dh]
                 for h in range(nH)]
        return jnp.concatenate(parts, axis=0)

    q = stack_heads(0).astype(jnp.bfloat16)
    k = stack_heads(H).astype(jnp.bfloat16)
    v = stack_heads(2 * H).astype(jnp.bfloat16)

    bias = (1.0 - mask_ref[...]) * -10000.0         # (B, 1, S) additive mask
    bias = jnp.concatenate([bias] * nH, axis=0)     # (nH*B, 1, S)

    s = jnp.einsum("bqd,bkd->bqk", q, k,
                   preferred_element_type=jnp.float32)              # (nH*B,S,S)
    s = s * (1.0 / float(Dh) ** 0.5) + bias
    s = s - jnp.max(s, axis=-1, keepdims=True)
    p = jnp.exp(s)
    p = p * pl.reciprocal(jnp.sum(p, axis=-1, keepdims=True), approx=True)

    ctx = jnp.einsum("bqk,bkd->bqd", p.astype(jnp.bfloat16), v,
                     preferred_element_type=jnp.float32)            # (nH*B,S,Dh)
    ctx4 = ctx.reshape(nH, B, S, Dh)
    ctx = jnp.concatenate([ctx4[h] for h in range(nH)], axis=-1)    # (B, S, H)
    ctx = ctx.reshape(M, H)

    attn = jnp.dot(ctx.astype(jnp.bfloat16), wo_ref[...],
                   preferred_element_type=jnp.float32) + bo
    x = _layernorm(attn + x, ln1_g, ln1_b, eps)

    # ----------------------------------- FFN -----------------------------------
    h1 = jnp.dot(x.astype(jnp.bfloat16), wi_ref[...],
                 preferred_element_type=jnp.float32)
    h1 = _gelu(h1 + bi)
    h2 = jnp.dot(h1.astype(jnp.bfloat16), wf_ref[...],
                 preferred_element_type=jnp.float32) + bf_b
    x_new = _layernorm(h2 + x, ln2_g, ln2_b, eps)
    x_sc[...] = x_new

    # ---------------- last layer: fused classifier head ------------------------
    @pl.when(layer == pl.num_programs(0) - 1)
    def _():
        # select the [CLS] row of every sequence (rows 0, S, 2S, ...) with a
        # tiny selection matmul (no sublane relayout needed)
        col = jax.lax.broadcasted_iota(jnp.int32, (B, M), 1)
        tgt = jax.lax.broadcasted_iota(jnp.int32, (B, M), 0) * S
        sel = (col == tgt).astype(jnp.float32)                      # (B, M)
        cls = jnp.dot(sel, x_new, preferred_element_type=jnp.float32)  # (B, H)

        e = jnp.dot(cls.astype(jnp.bfloat16), wfc_ref[...],
                    preferred_element_type=jnp.float32)
        e = e + head_b_ref[0:1, 0:3 * H]                            # (B, 3H)
        t = jnp.dot(e.astype(jnp.bfloat16), wout_ref[...],
                    preferred_element_type=jnp.float32)
        t = t + head_b_ref[1:2, :]                                  # (B, 128)
        o_ref[...] = t                                              # lane-dense


# --------------------------------------------------------------------------
# pallas_call wrapper (the whole forward pass = ONE pallas_call)
# --------------------------------------------------------------------------
def bert_classifier_forward(packed, input_idxs, input_mask, cfg):
    B, S = input_idxs.shape
    H, I, V = cfg["hidden"], cfg["intermediate"], cfg["n_tgt_vocab"]
    L, nH = cfg["n_layers"], cfg["n_heads"]
    vocab = cfg["vocab_size"]
    M = B * S
    assert S % 8 == 0, "sequence length must be a multiple of 8"
    assert S <= cfg["max_pos"], "sequence length exceeds max position embeddings"

    idx = input_idxs.reshape(M, 1).astype(jnp.int32)
    mask3 = input_mask.astype(jnp.float32).reshape(B, 1, S)

    def fixed(shape):
        n = len(shape)
        return pl.BlockSpec(shape, lambda l, _n=n: (0,) * _n)

    def per_layer(shape):  # stacked (L, *shape); layer dim squeezed
        n = len(shape)
        return pl.BlockSpec((None,) + shape, lambda l, _n=n: (l,) + (0,) * _n)

    kernel = functools.partial(
        _bert_kernel, batch=B, seq=S, n_heads=nH, head_dim=H // nH,
        hidden=H, inter=I, vocab=vocab, eps=1e-12)

    out = pl.pallas_call(
        kernel,
        grid=(L,),
        in_specs=[
            fixed((M, 1)),               # token ids
            fixed((B, 1, S)),            # attention mask
            fixed((vocab, H)),           # token embedding table
            fixed((S, H)),               # pos + type embeddings (first S rows)
            fixed((2, H)),               # embedding LN gamma/beta
            fixed((H, 3 * H)),           # classifier fc1|fc2|fc3 (fused)
            fixed((3 * H, 128)),         # block-diag out1|out2|out3 (lane-padded)
            fixed((2, 128)),             # classifier bias slab
            per_layer((H, 3 * H)),       # wqkv
            per_layer((H, H)),           # wo
            per_layer((H, I)),           # wi
            per_layer((I, H)),           # wf
            per_layer((8, 128)),         # per-layer small-vector slab
        ],
        out_specs=fixed((B, 128)),
        out_shape=jax.ShapeDtypeStruct((B, 128), jnp.float32),
        scratch_shapes=[pltpu.VMEM((M, H), jnp.float32)],   # resident residual
        compiler_params=pltpu.CompilerParams(
            dimension_semantics=("arbitrary",)),
    )(idx, mask3, packed["tok_emb"], packed["pos_type"], packed["emb_ln"],
      packed["wfc"], packed["wout"], packed["head_b"],
      packed["wqkv"], packed["wo"], packed["wi"], packed["wf"], packed["vec"])

    return out[:, 0:V], out[:, V:2 * V], out[:, 2 * V:3 * V]


# --------------------------------------------------------------------------
# deterministic parameter init (PyTorch layout) + host-side packing
# --------------------------------------------------------------------------
def init_params(key, cfg):
    keys = iter(jax.random.split(key, 256))

    def normal(shape, std=0.02):
        return (std * jax.random.normal(next(keys), shape)).astype(jnp.float32)

    H, I, V = cfg["hidden"], cfg["intermediate"], cfg["n_tgt_vocab"]
    p = {
        "tok_emb": normal((cfg["vocab_size"], H)),
        "pos_emb": normal((cfg["max_pos"], H)),
        "type_emb": normal((cfg["type_vocab"], H)),
        "emb_ln_g": jnp.ones((1, H), jnp.float32),
        "emb_ln_b": jnp.zeros((1, H), jnp.float32),
        "layers": [],
    }
    for _ in range(cfg["n_layers"]):
        p["layers"].append({
            "wq": normal((H, H)), "bq": jnp.zeros((1, H), jnp.float32),
            "wk": normal((H, H)), "bk": jnp.zeros((1, H), jnp.float32),
            "wv": normal((H, H)), "bv": jnp.zeros((1, H), jnp.float32),
            "wo": normal((H, H)), "bo": jnp.zeros((1, H), jnp.float32),
            "ln1_g": jnp.ones((1, H), jnp.float32),
            "ln1_b": jnp.zeros((1, H), jnp.float32),
            "wi": normal((I, H)), "bi": jnp.zeros((1, I), jnp.float32),
            "wf": normal((H, I)), "bf": jnp.zeros((1, H), jnp.float32),
            "ln2_g": jnp.ones((1, H), jnp.float32),
            "ln2_b": jnp.zeros((1, H), jnp.float32),
        })
    for name in ("fc1", "fc2", "fc3"):
        p[name + "_w"] = normal((H, H))
        p[name + "_b"] = jnp.zeros((1, H), jnp.float32)
    for name in ("out1", "out2", "out3"):
        p[name + "_w"] = normal((V, H))
        p[name + "_b"] = jnp.zeros((1, V), jnp.float32)
    return p


def pack_params(p, cfg):
    """Pre-transpose to (in,out), stack per-layer weights, cast MXU operands to
    bf16, fuse QKV / fc1-3 / out1-3, and coalesce small vectors into aligned
    slabs (one DMA each)."""
    H, I, V = cfg["hidden"], cfg["intermediate"], cfg["n_tgt_vocab"]
    bf16 = jnp.bfloat16

    def stack(fn):
        return jnp.stack([fn(l) for l in p["layers"]], axis=0)

    def layer_vec(l):
        slab = jnp.zeros((8, 128), jnp.float32)
        slab = slab.at[0, :3 * H].set(
            jnp.concatenate([l["bq"], l["bk"], l["bv"]], axis=1)[0])
        slab = slab.at[1, :H].set(l["bo"][0])
        slab = slab.at[2, :H].set(l["ln1_g"][0])
        slab = slab.at[3, :H].set(l["ln1_b"][0])
        slab = slab.at[4, :I].set(l["bi"][0])
        slab = slab.at[5, :H].set(l["bf"][0])
        slab = slab.at[6, :H].set(l["ln2_g"][0])
        slab = slab.at[7, :H].set(l["ln2_b"][0])
        return slab

    pk = {
        "tok_emb": p["tok_emb"],
        # pos + (token_type=0) embeddings folded host-side: (max_pos, H)
        "pos_type": p["pos_emb"] + p["type_emb"][0:1, :],
        "emb_ln": jnp.concatenate([p["emb_ln_g"], p["emb_ln_b"]], axis=0),
        # fused QKV: (L, H, 3H) bf16
        "wqkv": stack(lambda l: jnp.concatenate(
            [l["wq"].T, l["wk"].T, l["wv"].T], axis=1)).astype(bf16),
        "wo": stack(lambda l: l["wo"].T).astype(bf16),
        "wi": stack(lambda l: l["wi"].T).astype(bf16),
        "wf": stack(lambda l: l["wf"].T).astype(bf16),
        # coalesced per-layer small vectors: (L, 8, 128) f32
        "vec": jnp.stack([layer_vec(l) for l in p["layers"]], axis=0),
        # classifier head: fc1|fc2|fc3 -> (H, 3H) bf16
        "wfc": jnp.concatenate(
            [p["fc1_w"].T, p["fc2_w"].T, p["fc3_w"].T], axis=1).astype(bf16),
    }

    # block-diag output weights, lane-padded to 128 columns
    wout = jnp.zeros((3 * H, 128), jnp.float32)
    wout = wout.at[0:H, 0:V].set(p["out1_w"].T)
    wout = wout.at[H:2 * H, V:2 * V].set(p["out2_w"].T)
    wout = wout.at[2 * H:3 * H, 2 * V:3 * V].set(p["out3_w"].T)
    pk["wout"] = wout.astype(bf16)

    # classifier bias slab: row0 = fc biases (3H), row1 = output biases (3V)
    hb = jnp.zeros((2, 128), jnp.float32)
    hb = hb.at[0, :3 * H].set(
        jnp.concatenate([p["fc1_b"], p["fc2_b"], p["fc3_b"]], axis=1)[0])
    hb = hb.at[1, :3 * V].set(
        jnp.concatenate([p["out1_b"], p["out2_b"], p["out3_b"]], axis=1)[0])
    pk["head_b"] = hb
    return pk


# --------------------------------------------------------------------------
if __name__ == "__main__":
    B, S = 2, 8
    key = jax.random.PRNGKey(0)
    k_param, k_idx = jax.random.split(key)

    params = init_params(k_param, CFG)
    packed = pack_params(params, CFG)
    input_idxs = jax.random.randint(k_idx, (B, S), 0, CFG["vocab_size"], jnp.int32)
    input_mask = jnp.ones((B, S), jnp.float32).at[1, 6:].set(0.0)

    fwd = jax.jit(functools.partial(bert_classifier_forward, cfg=CFG))
    target_p, target_i, target_o = fwd(packed, input_idxs, input_mask)
    jax.block_until_ready((target_p, target_i, target_o))

    assert target_p.shape == (B, CFG["n_tgt_vocab"])
    assert target_i.shape == (B, CFG["n_tgt_vocab"])
    assert target_o.shape == (B, CFG["n_tgt_vocab"])
    assert bool(jnp.all(jnp.isfinite(target_p)))
    assert bool(jnp.all(jnp.isfinite(target_i)))
    assert bool(jnp.all(jnp.isfinite(target_o)))
    print("KERNEL_OK")
</pallas_src>

<mosaic_0001>
module attributes {stable_mosaic.version = 11 : i64} {
  func.func @_bert_kernel(%arg0: i32, %arg1: memref<16x1xi32, #tpu.memory_space<vmem>>, %arg2: memref<2x1x8xf32, #tpu.memory_space<vmem>>, %arg3: memref<50x32xf32, #tpu.memory_space<vmem>>, %arg4: memref<8x32xf32, #tpu.memory_space<vmem>>, %arg5: memref<2x32xf32, #tpu.memory_space<vmem>>, %arg6: memref<32x96xbf16, #tpu.memory_space<vmem>>, %arg7: memref<96x128xbf16, #tpu.memory_space<vmem>>, %arg8: memref<2x128xf32, #tpu.memory_space<vmem>>, %arg9: memref<1x32x96xbf16, #tpu.memory_space<vmem>>, %arg10: memref<1x32x32xbf16, #tpu.memory_space<vmem>>, %arg11: memref<1x32x64xbf16, #tpu.memory_space<vmem>>, %arg12: memref<1x64x32xbf16, #tpu.memory_space<vmem>>, %arg13: memref<1x8x128xf32, #tpu.memory_space<vmem>>, %arg14: memref<2x128xf32, #tpu.memory_space<vmem>>, %arg15: memref<16x32xf32, #tpu.memory_space<vmem>>) attributes {dimension_semantics = [#tpu.dimension_semantics<arbitrary>], iteration_bounds = array<i64: 2>, scalar_prefetch = 0 : i64, scratch_operands = 1 : i64, tpu.core_type = #tpu.core_type<tc>, window_params = [{pipeline_mode = #tpu.pipeline_mode<synchronous>, transform_indices = @transform_0, window_bounds = array<i64: 16, 1>}, {pipeline_mode = #tpu.pipeline_mode<synchronous>, transform_indices = @transform_1, window_bounds = array<i64: 2, 1, 8>}, {pipeline_mode = #tpu.pipeline_mode<synchronous>, transform_indices = @transform_2, window_bounds = array<i64: 50, 32>}, {transform_indices = @transform_3, window_bounds = array<i64: 8, 32>}, {pipeline_mode = #tpu.pipeline_mode<synchronous>, transform_indices = @transform_4, window_bounds = array<i64: 2, 32>}, {pipeline_mode = #tpu.pipeline_mode<synchronous>, transform_indices = @transform_5, window_bounds = array<i64: 32, 96>}, {pipeline_mode = #tpu.pipeline_mode<synchronous>, transform_indices = @transform_6, window_bounds = array<i64: 96, 128>}, {pipeline_mode = #tpu.pipeline_mode<synchronous>, transform_indices = @transform_7, window_bounds = array<i64: 2, 128>}, {transform_indices = @transform_8, window_bounds = array<i64: 1, 32, 96>}, {transform_indices = @transform_9, window_bounds = array<i64: 1, 32, 32>}, {transform_indices = @transform_10, window_bounds = array<i64: 1, 32, 64>}, {transform_indices = @transform_11, window_bounds = array<i64: 1, 64, 32>}, {transform_indices = @transform_12, window_bounds = array<i64: 1, 8, 128>}, {pipeline_mode = #tpu.pipeline_mode<synchronous>, transform_indices = @transform_13, window_bounds = array<i64: 2, 128>}]} {
    %c0_i32 = arith.constant 0 : i32
    %0 = arith.cmpi eq, %arg0, %c0_i32 : i32
    %1 = arith.extui %0 : i1 to i32
    %c0_i32_0 = arith.constant 0 : i32
    %2 = arith.cmpi ne, %1, %c0_i32_0 : i32
    scf.if %2 {
      %160 = tpu.iota {dimensions = array<i32: 1>} : vector<16x50xi32>
      %c0_61 = arith.constant 0 : index
      %c0_62 = arith.constant 0 : index
      %161 = vector.load %arg1[%c0_61, %c0_62] : memref<16x1xi32, #tpu.memory_space<vmem>>, vector<16x1xi32>
      %162 = vector.broadcast %161 : vector<16x1xi32> to vector<16x50xi32>
      %163 = arith.cmpi eq, %160, %162 : vector<16x50xi32>
      %164 = arith.extui %163 : vector<16x50xi1> to vector<16x50xi32>
      %165 = arith.sitofp %164 : vector<16x50xi32> to vector<16x50xf32>
      %c0_63 = arith.constant 0 : index
      %c0_64 = arith.constant 0 : index
      %166 = vector.load %arg3[%c0_63, %c0_64] : memref<50x32xf32, #tpu.memory_space<vmem>>, vector<50x32xf32>
      %cst_65 = arith.constant dense<0.000000e+00> : vector<16x32xf32>
      %167 = tpu.matmul %165, %166, %cst_65 {dimension_numbers = #tpu.dot_dimension_numbers<[1], [0], [0], [1], [0, 0, 1, 1], [], []>} : vector<16x50xf32>, vector<50x32xf32>, vector<16x32xf32> -> vector<16x32xf32>
      %c0_66 = arith.constant 0 : index
      %c0_67 = arith.constant 0 : index
      %168 = vector.load %arg4[%c0_66, %c0_67] : memref<8x32xf32, #tpu.memory_space<vmem>>, vector<8x32xf32>
      %169 = vector.shape_cast %168 : vector<8x32xf32> to vector<1x8x32xf32>
      %170 = vector.shape_cast %169 : vector<1x8x32xf32> to vector<1x8x32xf32>
      %171 = vector.broadcast %170 : vector<1x8x32xf32> to vector<2x8x32xf32>
      %172 = vector.shape_cast %171 : vector<2x8x32xf32> to vector<16x32xf32>
      %173 = arith.addf %167, %172 : vector<16x32xf32>
      %c0_68 = arith.constant 0 : index
      %c0_69 = arith.constant 0 : index
      %174 = vector.load %arg5[%c0_68, %c0_69] : memref<2x32xf32, #tpu.memory_space<vmem>>, vector<1x32xf32>
      %c1_70 = arith.constant 1 : index
      %c0_71 = arith.constant 0 : index
      %175 = vector.load %arg5[%c1_70, %c0_71] : memref<2x32xf32, #tpu.memory_space<vmem>>, vector<1x32xf32>
      %cst_72 = arith.constant dense<0.000000e+00> : vector<16xf32>
      %176 = vector.multi_reduction <add>, %173, %cst_72 [1] : vector<16x32xf32> to vector<16xf32>
      %177 = vector.shape_cast %176 : vector<16xf32> to vector<16x1xf32>
      %cst_73 = arith.constant 3.200000e+01 : f32
      %178 = vector.broadcast %cst_73 : f32 to vector<16x1xf32>
      %179 = arith.divf %177, %178 : vector<16x1xf32>
      %180 = vector.broadcast %179 : vector<16x1xf32> to vector<16x32xf32>
      %181 = arith.subf %173, %180 : vector<16x32xf32>
      %182 = arith.mulf %181, %181 : vector<16x32xf32>
      %cst_74 = arith.constant dense<0.000000e+00> : vector<16xf32>
      %183 = vector.multi_reduction <add>, %182, %cst_74 [1] : vector<16x32xf32> to vector<16xf32>
      %184 = vector.shape_cast %183 : vector<16xf32> to vector<16x1xf32>
      %cst_75 = arith.constant 3.200000e+01 : f32
      %185 = vector.broadcast %cst_75 : f32 to vector<16x1xf32>
      %186 = arith.divf %184, %185 : vector<16x1xf32>
      %187 = vector.broadcast %179 : vector<16x1xf32> to vector<16x32xf32>
      %188 = arith.subf %173, %187 : vector<16x32xf32>
      %cst_76 = arith.constant 9.99999996E-13 : f32
      %189 = vector.broadcast %cst_76 : f32 to vector<16x1xf32>
      %190 = arith.addf %186, %189 : vector<16x1xf32>
      %191 = math.rsqrt %190 : vector<16x1xf32>
      %192 = vector.broadcast %191 : vector<16x1xf32> to vector<16x32xf32>
      %193 = arith.mulf %188, %192 : vector<16x32xf32>
      %194 = vector.broadcast %174 : vector<1x32xf32> to vector<16x32xf32>
      %195 = arith.mulf %193, %194 : vector<16x32xf32>
      %196 = vector.broadcast %175 : vector<1x32xf32> to vector<16x32xf32>
      %197 = arith.addf %195, %196 : vector<16x32xf32>
      %c0_77 = arith.constant 0 : index
      %c0_78 = arith.constant 0 : index
      %198 = vector.load %arg15[%c0_77, %c0_78] : memref<16x32xf32, #tpu.memory_space<vmem>>, vector<16x32xf32>
      tpu.vector_store %arg15[%c0_77, %c0_78], %197 {strides = array<i32>} : memref<16x32xf32, #tpu.memory_space<vmem>>, vector<16x32xf32>,
    } else {
    }
    %c0 = arith.constant 0 : index
    %c0_1 = arith.constant 0 : index
    %3 = vector.load %arg15[%c0, %c0_1] : memref<16x32xf32, #tpu.memory_space<vmem>>, vector<16x32xf32>
    %4 = arith.truncf %3 : vector<16x32xf32> to vector<16x32xbf16>
    %c0_2 = arith.constant 0 : index
    %c0_3 = arith.constant 0 : index
    %c0_4 = arith.constant 0 : index
    %5 = vector.load %arg13[%c0_2, %c0_3, %c0_4] : memref<1x8x128xf32, #tpu.memory_space<vmem>>, vector<1x1x96xf32>
    %6 = vector.shape_cast %5 : vector<1x1x96xf32> to vector<1x96xf32>
    %c0_5 = arith.constant 0 : index
    %c1 = arith.constant 1 : index
    %c0_6 = arith.constant 0 : index
    %7 = vector.load %arg13[%c0_5, %c1, %c0_6] : memref<1x8x128xf32, #tpu.memory_space<vmem>>, vector<1x1x32xf32>
    %8 = vector.shape_cast %7 : vector<1x1x32xf32> to vector<1x32xf32>
    %c0_7 = arith.constant 0 : index
    %c2 = arith.constant 2 : index
    %c0_8 = arith.constant 0 : index
    %9 = vector.load %arg13[%c0_7, %c2, %c0_8] : memref<1x8x128xf32, #tpu.memory_space<vmem>>, vector<1x1x32xf32>
    %10 = vector.shape_cast %9 : vector<1x1x32xf32> to vector<1x32xf32>
    %c0_9 = arith.constant 0 : index
    %c3 = arith.constant 3 : index
    %c0_10 = arith.constant 0 : index
    %11 = vector.load %arg13[%c0_9, %c3, %c0_10] : memref<1x8x128xf32, #tpu.memory_space<vmem>>, vector<1x1x32xf32>
    %12 = vector.shape_cast %11 : vector<1x1x32xf32> to vector<1x32xf32>
    %c0_11 = arith.constant 0 : index
    %c4 = arith.constant 4 : index
    %c0_12 = arith.constant 0 : index
    %13 = vector.load %arg13[%c0_11, %c4, %c0_12] : memref<1x8x128xf32, #tpu.memory_space<vmem>>, vector<1x1x64xf32>
    %14 = vector.shape_cast %13 : vector<1x1x64xf32> to vector<1x64xf32>
    %c0_13 = arith.constant 0 : index
    %c5 = arith.constant 5 : index
    %c0_14 = arith.constant 0 : index
    %15 = vector.load %arg13[%c0_13, %c5, %c0_14] : memref<1x8x128xf32, #tpu.memory_space<vmem>>, vector<1x1x32xf32>
    %16 = vector.shape_cast %15 : vector<1x1x32xf32> to vector<1x32xf32>
    %c0_15 = arith.constant 0 : index
    %c6 = arith.constant 6 : index
    %c0_16 = arith.constant 0 : index
    %17 = vector.load %arg13[%c0_15, %c6, %c0_16] : memref<1x8x128xf32, #tpu.memory_space<vmem>>, vector<1x1x32xf32>
    %18 = vector.shape_cast %17 : vector<1x1x32xf32> to vector<1x32xf32>
    %c0_17 = arith.constant 0 : index
    %c7 = arith.constant 7 : index
    %c0_18 = arith.constant 0 : index
    %19 = vector.load %arg13[%c0_17, %c7, %c0_18] : memref<1x8x128xf32, #tpu.memory_space<vmem>>, vector<1x1x32xf32>
    %20 = vector.shape_cast %19 : vector<1x1x32xf32> to vector<1x32xf32>
    %c0_19 = arith.constant 0 : index
    %c0_20 = arith.constant 0 : index
    %c0_21 = arith.constant 0 : index
    %21 = vector.load %arg9[%c0_19, %c0_20, %c0_21] : memref<1x32x96xbf16, #tpu.memory_space<vmem>>, vector<1x32x96xbf16>
    %22 = vector.shape_cast %21 : vector<1x32x96xbf16> to vector<32x96xbf16>
    %cst = arith.constant dense<0.000000e+00> : vector<16x96xf32>
    %23 = tpu.matmul %4, %22, %cst {dimension_numbers = #tpu.dot_dimension_numbers<[1], [0], [0], [1], [0, 0, 1, 1], [], []>} : vector<16x32xbf16>, vector<32x96xbf16>, vector<16x96xf32> -> vector<16x96xf32>
    %24 = vector.broadcast %6 : vector<1x96xf32> to vector<16x96xf32>
    %25 = arith.addf %23, %24 : vector<16x96xf32>
    %26 = vector.shape_cast %25 : vector<16x96xf32> to vector<2x8x96xf32>
    %27 = vector.extract_strided_slice %26 {offsets = [0, 0, 0], sizes = [2, 8, 8], strides = [1, 1, 1]} : vector<2x8x96xf32> to vector<2x8x8xf32>
    %28 = vector.extract_strided_slice %26 {offsets = [0, 0, 8], sizes = [2, 8, 8], strides = [1, 1, 1]} : vector<2x8x96xf32> to vector<2x8x8xf32>
    %29 = vector.extract_strided_slice %26 {offsets = [0, 0, 16], sizes = [2, 8, 8], strides = [1, 1, 1]} : vector<2x8x96xf32> to vector<2x8x8xf32>
    %30 = vector.extract_strided_slice %26 {offsets = [0, 0, 24], sizes = [2, 8, 8], strides = [1, 1, 1]} : vector<2x8x96xf32> to vector<2x8x8xf32>
    %31 = tpu.concatenate %27, %28, %29, %30 in 0 : vector<2x8x8xf32>, vector<2x8x8xf32>, vector<2x8x8xf32>, vector<2x8x8xf32> -> vector<8x8x8xf32>
    %32 = arith.truncf %31 : vector<8x8x8xf32> to vector<8x8x8xbf16>
    %33 = vector.extract_strided_slice %26 {offsets = [0, 0, 32], sizes = [2, 8, 8], strides = [1, 1, 1]} : vector<2x8x96xf32> to vector<2x8x8xf32>
    %34 = vector.extract_strided_slice %26 {offsets = [0, 0, 40], sizes = [2, 8, 8], strides = [1, 1, 1]} : vector<2x8x96xf32> to vector<2x8x8xf32>
    %35 = vector.extract_strided_slice %26 {offsets = [0, 0, 48], sizes = [2, 8, 8], strides = [1, 1, 1]} : vector<2x8x96xf32> to vector<2x8x8xf32>
    %36 = vector.extract_strided_slice %26 {offsets = [0, 0, 56], sizes = [2, 8, 8], strides = [1, 1, 1]} : vector<2x8x96xf32> to vector<2x8x8xf32>
    %37 = tpu.concatenate %33, %34, %35, %36 in 0 : vector<2x8x8xf32>, vector<2x8x8xf32>, vector<2x8x8xf32>, vector<2x8x8xf32> -> vector<8x8x8xf32>
    %38 = arith.truncf %37 : vector<8x8x8xf32> to vector<8x8x8xbf16>
    %39 = vector.extract_strided_slice %26 {offsets = [0, 0, 64], sizes = [2, 8, 8], strides = [1, 1, 1]} : vector<2x8x96xf32> to vector<2x8x8xf32>
    %40 = vector.extract_strided_slice %26 {offsets = [0, 0, 72], sizes = [2, 8, 8], strides = [1, 1, 1]} : vector<2x8x96xf32> to vector<2x8x8xf32>
    %41 = vector.extract_strided_slice %26 {offsets = [0, 0, 80], sizes = [2, 8, 8], strides = [1, 1, 1]} : vector<2x8x96xf32> to vector<2x8x8xf32>
    %42 = vector.extract_strided_slice %26 {offsets = [0, 0, 88], sizes = [2, 8, 8], strides = [1, 1, 1]} : vector<2x8x96xf32> to vector<2x8x8xf32>
    %43 = tpu.concatenate %39, %40, %41, %42 in 0 : vector<2x8x8xf32>, vector<2x8x8xf32>, vector<2x8x8xf32>, vector<2x8x8xf32> -> vector<8x8x8xf32>
    %44 = arith.truncf %43 : vector<8x8x8xf32> to vector<8x8x8xbf16>
    %c0_22 = arith.constant 0 : index
    %c0_23 = arith.constant 0 : index
    %c0_24 = arith.constant 0 : index
    %45 = vector.load %arg2[%c0_22, %c0_23, %c0_24] : memref<2x1x8xf32, #tpu.memory_space<vmem>>, vector<2x1x8xf32>
    %cst_25 = arith.constant 1.000000e+00 : f32
    %46 = vector.broadcast %cst_25 : f32 to vector<2x1x8xf32>
    %47 = arith.subf %46, %45 : vector<2x1x8xf32>
    %cst_26 = arith.constant -1.000000e+04 : f32
    %48 = vector.broadcast %cst_26 : f32 to vector<2x1x8xf32>
    %49 = arith.mulf %47, %48 : vector<2x1x8xf32>
    %50 = tpu.concatenate %49, %49, %49, %49 in 0 : vector<2x1x8xf32>, vector<2x1x8xf32>, vector<2x1x8xf32>, vector<2x1x8xf32> -> vector<8x1x8xf32>
    "tpu.trace_start"() <{level = 10 : i32, message = "bqd,bkd->bqk"}> : () -> ()
    %cst_27 = arith.constant dense<0.000000e+00> : vector<8x8x8xf32>
    %51 = tpu.matmul %32, %38, %cst_27 {dimension_numbers = #tpu.dot_dimension_numbers<[2], [2], [1], [1], [0, 0, 0, 1, 1, 1], [0], [0]>} : vector<8x8x8xbf16>, vector<8x8x8xbf16>, vector<8x8x8xf32> -> vector<8x8x8xf32>
    "tpu.trace_stop"() : () -> ()
    %cst_28 = arith.constant 0.353553385 : f32
    %52 = vector.broadcast %cst_28 : f32 to vector<8x8x8xf32>
    %53 = arith.mulf %51, %52 : vector<8x8x8xf32>
    %54 = vector.broadcast %50 : vector<8x1x8xf32> to vector<8x8x8xf32>
    %55 = arith.addf %53, %54 : vector<8x8x8xf32>
    %cst_29 = arith.constant dense<0xFF800000> : vector<8x8xf32>
    %56 = vector.multi_reduction <maximumf>, %55, %cst_29 [2] : vector<8x8x8xf32> to vector<8x8xf32>
    %57 = vector.shape_cast %56 : vector<8x8xf32> to vector<8x8x1xf32>
    %58 = vector.broadcast %57 : vector<8x8x1xf32> to vector<8x8x8xf32>
    %59 = arith.subf %55, %58 : vector<8x8x8xf32>
    %60 = math.exp %59 : vector<8x8x8xf32>
    %cst_30 = arith.constant dense<0.000000e+00> : vector<8x8xf32>
    %61 = vector.multi_reduction <add>, %60, %cst_30 [2] : vector<8x8x8xf32> to vector<8x8xf32>
    %62 = vector.shape_cast %61 : vector<8x8xf32> to vector<8x8x1xf32>
    %63 = tpu.reciprocal %62 {approx = true} : vector<8x8x1xf32> -> vector<8x8x1xf32>
    %64 = vector.broadcast %63 : vector<8x8x1xf32> to vector<8x8x8xf32>
    %65 = arith.mulf %60, %64 : vector<8x8x8xf32>
    %66 = arith.truncf %65 : vector<8x8x8xf32> to vector<8x8x8xbf16>
    "tpu.trace_start"() <{level = 10 : i32, message = "bqk,bkd->bqd"}> : () -> ()
    %cst_31 = arith.constant dense<0.000000e+00> : vector<8x8x8xf32>
    %67 = tpu.matmul %66, %44, %cst_31 {dimension_numbers = #tpu.dot_dimension_numbers<[2], [1], [1], [2], [0, 0, 0, 1, 1, 2], [0], [0]>} : vector<8x8x8xbf16>, vector<8x8x8xbf16>, vector<8x8x8xf32> -> vector<8x8x8xf32>
    "tpu.trace_stop"() : () -> ()
    %68 = vector.shape_cast %67 : vector<8x8x8xf32> to vector<4x2x8x8xf32>
    %69 = vector.extract_strided_slice %68 {offsets = [0, 0, 0, 0], sizes = [1, 2, 8, 8], strides = [1, 1, 1, 1]} : vector<4x2x8x8xf32> to vector<1x2x8x8xf32>
    %70 = vector.shape_cast %69 : vector<1x2x8x8xf32> to vector<2x8x8xf32>
    %71 = vector.extract_strided_slice %68 {offsets = [1, 0, 0, 0], sizes = [1, 2, 8, 8], strides = [1, 1, 1, 1]} : vector<4x2x8x8xf32> to vector<1x2x8x8xf32>
    %72 = vector.shape_cast %71 : vector<1x2x8x8xf32> to vector<2x8x8xf32>
    %73 = vector.extract_strided_slice %68 {offsets = [2, 0, 0, 0], sizes = [1, 2, 8, 8], strides = [1, 1, 1, 1]} : vector<4x2x8x8xf32> to vector<1x2x8x8xf32>
    %74 = vector.shape_cast %73 : vector<1x2x8x8xf32> to vector<2x8x8xf32>
    %75 = vector.extract_strided_slice %68 {offsets = [3, 0, 0, 0], sizes = [1, 2, 8, 8], strides = [1, 1, 1, 1]} : vector<4x2x8x8xf32> to vector<1x2x8x8xf32>
    %76 = vector.shape_cast %75 : vector<1x2x8x8xf32> to vector<2x8x8xf32>
    %77 = tpu.concatenate %70, %72, %74, %76 in 2 : vector<2x8x8xf32>, vector<2x8x8xf32>, vector<2x8x8xf32>, vector<2x8x8xf32> -> vector<2x8x32xf32>
    %78 = vector.shape_cast %77 : vector<2x8x32xf32> to vector<16x32xf32>
    %79 = arith.truncf %78 : vector<16x32xf32> to vector<16x32xbf16>
    %c0_32 = arith.constant 0 : index
    %c0_33 = arith.constant 0 : index
    %c0_34 = arith.constant 0 : index
    %80 = vector.load %arg10[%c0_32, %c0_33, %c0_34] : memref<1x32x32xbf16, #tpu.memory_space<vmem>>, vector<1x32x32xbf16>
    %81 = vector.shape_cast %80 : vector<1x32x32xbf16> to vector<32x32xbf16>
    %cst_35 = arith.constant dense<0.000000e+00> : vector<16x32xf32>
    %82 = tpu.matmul %79, %81, %cst_35 {dimension_numbers = #tpu.dot_dimension_numbers<[1], [0], [0], [1], [0, 0, 1, 1], [], []>} : vector<16x32xbf16>, vector<32x32xbf16>, vector<16x32xf32> -> vector<16x32xf32>
    %83 = vector.broadcast %8 : vector<1x32xf32> to vector<16x32xf32>
    %84 = arith.addf %82, %83 : vector<16x32xf32>
    %85 = arith.addf %84, %3 : vector<16x32xf32>
    %cst_36 = arith.constant dense<0.000000e+00> : vector<16xf32>
    %86 = vector.multi_reduction <add>, %85, %cst_36 [1] : vector<16x32xf32> to vector<16xf32>
    %87 = vector.shape_cast %86 : vector<16xf32> to vector<16x1xf32>
    %cst_37 = arith.constant 3.200000e+01 : f32
    %88 = vector.broadcast %cst_37 : f32 to vector<16x1xf32>
    %89 = arith.divf %87, %88 : vector<16x1xf32>
    %90 = vector.broadcast %89 : vector<16x1xf32> to vector<16x32xf32>
    %91 = arith.subf %85, %90 : vector<16x32xf32>
    %92 = arith.mulf %91, %91 : vector<16x32xf32>
    %cst_38 = arith.constant dense<0.000000e+00> : vector<16xf32>
    %93 = vector.multi_reduction <add>, %92, %cst_38 [1] : vector<16x32xf32> to vector<16xf32>
    %94 = vector.shape_cast %93 : vector<16xf32> to vector<16x1xf32>
    %cst_39 = arith.constant 3.200000e+01 : f32
    %95 = vector.broadcast %cst_39 : f32 to vector<16x1xf32>
    %96 = arith.divf %94, %95 : vector<16x1xf32>
    %97 = vector.broadcast %89 : vector<16x1xf32> to vector<16x32xf32>
    %98 = arith.subf %85, %97 : vector<16x32xf32>
    %cst_40 = arith.constant 9.99999996E-13 : f32
    %99 = vector.broadcast %cst_40 : f32 to vector<16x1xf32>
    %100 = arith.addf %96, %99 : vector<16x1xf32>
    %101 = math.rsqrt %100 : vector<16x1xf32>
    %102 = vector.broadcast %101 : vector<16x1xf32> to vector<16x32xf32>
    %103 = arith.mulf %98, %102 : vector<16x32xf32>
    %104 = vector.broadcast %10 : vector<1x32xf32> to vector<16x32xf32>
    %105 = arith.mulf %103, %104 : vector<16x32xf32>
    %106 = vector.broadcast %12 : vector<1x32xf32> to vector<16x32xf32>
    %107 = arith.addf %105, %106 : vector<16x32xf32>
    %108 = arith.truncf %107 : vector<16x32xf32> to vector<16x32xbf16>
    %c0_41 = arith.constant 0 : index
    %c0_42 = arith.constant 0 : index
    %c0_43 = arith.constant 0 : index
    %109 = vector.load %arg11[%c0_41, %c0_42, %c0_43] : memref<1x32x64xbf16, #tpu.memory_space<vmem>>, vector<1x32x64xbf16>
    %110 = vector.shape_cast %109 : vector<1x32x64xbf16> to vector<32x64xbf16>
    %cst_44 = arith.constant dense<0.000000e+00> : vector<16x64xf32>
    %111 = tpu.matmul %108, %110, %cst_44 {dimension_numbers = #tpu.dot_dimension_numbers<[1], [0], [0], [1], [0, 0, 1, 1], [], []>} : vector<16x32xbf16>, vector<32x64xbf16>, vector<16x64xf32> -> vector<16x64xf32>
    %112 = vector.broadcast %14 : vector<1x64xf32> to vector<16x64xf32>
    %113 = arith.addf %111, %112 : vector<16x64xf32>
    %cst_45 = arith.constant 5.000000e-01 : f32
    %114 = vector.broadcast %cst_45 : f32 to vector<16x64xf32>
    %115 = arith.mulf %114, %113 : vector<16x64xf32>
    %cst_46 = arith.constant 4.471500e-02 : f32
    %116 = vector.broadcast %cst_46 : f32 to vector<16x64xf32>
    %117 = arith.mulf %116, %113 : vector<16x64xf32>
    %118 = arith.mulf %117, %113 : vector<16x64xf32>
    %119 = arith.mulf %118, %113 : vector<16x64xf32>
    %120 = arith.addf %113, %119 : vector<16x64xf32>
    %cst_47 = arith.constant 0.797884583 : f32
    %121 = vector.broadcast %cst_47 : f32 to vector<16x64xf32>
    %122 = arith.mulf %121, %120 : vector<16x64xf32>
    %123 = math.tanh %122 : vector<16x64xf32>
    %cst_48 = arith.constant 1.000000e+00 : f32
    %124 = vector.broadcast %cst_48 : f32 to vector<16x64xf32>
    %125 = arith.addf %124, %123 : vector<16x64xf32>
    %126 = arith.mulf %115, %125 : vector<16x64xf32>
    %127 = arith.truncf %126 : vector<16x64xf32> to vector<16x64xbf16>
    %c0_49 = arith.constant 0 : index
    %c0_50 = arith.constant 0 : index
    %c0_51 = arith.constant 0 : index
    %128 = vector.load %arg12[%c0_49, %c0_50, %c0_51] : memref<1x64x32xbf16, #tpu.memory_space<vmem>>, vector<1x64x32xbf16>
    %129 = vector.shape_cast %128 : vector<1x64x32xbf16> to vector<64x32xbf16>
    %cst_52 = arith.constant dense<0.000000e+00> : vector<16x32xf32>
    %130 = tpu.matmul %127, %129, %cst_52 {dimension_numbers = #tpu.dot_dimension_numbers<[1], [0], [0], [1], [0, 0, 1, 1], [], []>} : vector<16x64xbf16>, vector<64x32xbf16>, vector<16x32xf32> -> vector<16x32xf32>
    %131 = vector.broadcast %16 : vector<1x32xf32> to vector<16x32xf32>
    %132 = arith.addf %130, %131 : vector<16x32xf32>
    %133 = arith.addf %132, %107 : vector<16x32xf32>
    %cst_53 = arith.constant dense<0.000000e+00> : vector<16xf32>
    %134 = vector.multi_reduction <add>, %133, %cst_53 [1] : vector<16x32xf32> to vector<16xf32>
    %135 = vector.shape_cast %134 : vector<16xf32> to vector<16x1xf32>
    %cst_54 = arith.constant 3.200000e+01 : f32
    %136 = vector.broadcast %cst_54 : f32 to vector<16x1xf32>
    %137 = arith.divf %135, %136 : vector<16x1xf32>
    %138 = vector.broadcast %137 : vector<16x1xf32> to vector<16x32xf32>
    %139 = arith.subf %133, %138 : vector<16x32xf32>
    %140 = arith.mulf %139, %139 : vector<16x32xf32>
    %cst_55 = arith.constant dense<0.000000e+00> : vector<16xf32>
    %141 = vector.multi_reduction <add>, %140, %cst_55 [1] : vector<16x32xf32> to vector<16xf32>
    %142 = vector.shape_cast %141 : vector<16xf32> to vector<16x1xf32>
    %cst_56 = arith.constant 3.200000e+01 : f32
    %143 = vector.broadcast %cst_56 : f32 to vector<16x1xf32>
    %144 = arith.divf %142, %143 : vector<16x1xf32>
    %145 = vector.broadcast %137 : vector<16x1xf32> to vector<16x32xf32>
    %146 = arith.subf %133, %145 : vector<16x32xf32>
    %cst_57 = arith.constant 9.99999996E-13 : f32
    %147 = vector.broadcast %cst_57 : f32 to vector<16x1xf32>
    %148 = arith.addf %144, %147 : vector<16x1xf32>
    %149 = math.rsqrt %148 : vector<16x1xf32>
    %150 = vector.broadcast %149 : vector<16x1xf32> to vector<16x32xf32>
    %151 = arith.mulf %146, %150 : vector<16x32xf32>
    %152 = vector.broadcast %18 : vector<1x32xf32> to vector<16x32xf32>
    %153 = arith.mulf %151, %152 : vector<16x32xf32>
    %154 = vector.broadcast %20 : vector<1x32xf32> to vector<16x32xf32>
    %155 = arith.addf %153, %154 : vector<16x32xf32>
    %c0_58 = arith.constant 0 : index
    %c0_59 = arith.constant 0 : index
    %156 = vector.load %arg15[%c0_58, %c0_59] : memref<16x32xf32, #tpu.memory_space<vmem>>, vector<16x32xf32>
    tpu.vector_store %arg15[%c0_58, %c0_59], %155 {strides = array<i32>} : memref<16x32xf32, #tpu.memory_space<vmem>>, vector<16x32xf32>,
    %c1_i32 = arith.constant 1 : i32
    %157 = arith.cmpi eq, %arg0, %c1_i32 : i32
    %158 = arith.extui %157 : i1 to i32
    %c0_i32_60 = arith.constant 0 : i32
    %159 = arith.cmpi ne, %158, %c0_i32_60 : i32
    scf.if %159 {
      %160 = tpu.iota {dimensions = array<i32: 1>} : vector<2x16xi32>
      %161 = tpu.iota {dimensions = array<i32: 0>} : vector<2x16xi32>
      %c8_i32 = arith.constant 8 : i32
      %162 = vector.broadcast %c8_i32 : i32 to vector<2x16xi32>
      %163 = arith.muli %161, %162 : vector<2x16xi32>
      %164 = arith.cmpi eq, %160, %163 : vector<2x16xi32>
      %165 = arith.extui %164 : vector<2x16xi1> to vector<2x16xi32>
      %166 = arith.sitofp %165 : vector<2x16xi32> to vector<2x16xf32>
      %cst_61 = arith.constant dense<0.000000e+00> : vector<2x32xf32>
      %167 = tpu.matmul %166, %155, %cst_61 {dimension_numbers = #tpu.dot_dimension_numbers<[1], [0], [0], [1], [0, 0, 1, 1], [], []>} : vector<2x16xf32>, vector<16x32xf32>, vector<2x32xf32> -> vector<2x32xf32>
      %168 = arith.truncf %167 : vector<2x32xf32> to vector<2x32xbf16>
      %c0_62 = arith.constant 0 : index
      %c0_63 = arith.constant 0 : index
      %169 = vector.load %arg6[%c0_62, %c0_63] : memref<32x96xbf16, #tpu.memory_space<vmem>>, vector<32x96xbf16>
      %cst_64 = arith.constant dense<0.000000e+00> : vector<2x96xf32>
      %170 = tpu.matmul %168, %169, %cst_64 {dimension_numbers = #tpu.dot_dimension_numbers<[1], [0], [0], [1], [0, 0, 1, 1], [], []>} : vector<2x32xbf16>, vector<32x96xbf16>, vector<2x96xf32> -> vector<2x96xf32>
      %c0_65 = arith.constant 0 : index
      %c0_66 = arith.constant 0 : index
      %171 = vector.load %arg8[%c0_65, %c0_66] : memref<2x128xf32, #tpu.memory_space<vmem>>, vector<1x96xf32>
      %172 = vector.broadcast %171 : vector<1x96xf32> to vector<2x96xf32>
      %173 = arith.addf %170, %172 : vector<2x96xf32>
      %174 = arith.truncf %173 : vector<2x96xf32> to vector<2x96xbf16>
      %c0_67 = arith.constant 0 : index
      %c0_68 = arith.constant 0 : index
      %175 = vector.load %arg7[%c0_67, %c0_68] : memref<96x128xbf16, #tpu.memory_space<vmem>>, vector<96x128xbf16>
      %cst_69 = arith.constant dense<0.000000e+00> : vector<2x128xf32>
      %176 = tpu.matmul %174, %175, %cst_69 {dimension_numbers = #tpu.dot_dimension_numbers<[1], [0], [0], [1], [0, 0, 1, 1], [], []>} : vector<2x96xbf16>, vector<96x128xbf16>, vector<2x128xf32> -> vector<2x128xf32>
      %c1_70 = arith.constant 1 : index
      %c0_71 = arith.constant 0 : index
      %177 = vector.load %arg8[%c1_70, %c0_71] : memref<2x128xf32, #tpu.memory_space<vmem>>, vector<1x128xf32>
      %178 = vector.broadcast %177 : vector<1x128xf32> to vector<2x128xf32>
      %179 = arith.addf %176, %178 : vector<2x128xf32>
      %c0_72 = arith.constant 0 : index
      %c0_73 = arith.constant 0 : index
      %180 = vector.load %arg14[%c0_72, %c0_73] : memref<2x128xf32, #tpu.memory_space<vmem>>, vector<2x128xf32>
      tpu.vector_store %arg14[%c0_72, %c0_73], %179 {strides = array<i32>} : memref<2x128xf32, #tpu.memory_space<vmem>>, vector<2x128xf32>,
    } else {
    }
    return
  }
  func.func @transform_0(%arg0: i32) -> (i32, i32) {
    %c0_i32 = arith.constant 0 : i32
    %c0_i32_0 = arith.constant 0 : i32
    %c0_i32_1 = arith.constant 0 : i32
    return %c0_i32, %c0_i32_0 : i32, i32
  }
  func.func @transform_1(%arg0: i32) -> (i32, i32, i32) {
    %c0_i32 = arith.constant 0 : i32
    %c0_i32_0 = arith.constant 0 : i32
    %c0_i32_1 = arith.constant 0 : i32
    %c0_i32_2 = arith.constant 0 : i32
    return %c0_i32, %c0_i32_0, %c0_i32_1 : i32, i32, i32
  }
  func.func @transform_2(%arg0: i32) -> (i32, i32) {
    %c0_i32 = arith.constant 0 : i32
    %c0_i32_0 = arith.constant 0 : i32
    %c0_i32_1 = arith.constant 0 : i32
    return %c0_i32, %c0_i32_0 : i32, i32
  }
  func.func @transform_3(%arg0: i32) -> (i32, i32) {
    %c0_i32 = arith.constant 0 : i32
    %c0_i32_0 = arith.constant 0 : i32
    %c0_i32_1 = arith.constant 0 : i32
    return %c0_i32, %c0_i32_0 : i32, i32
  }
  func.func @transform_4(%arg0: i32) -> (i32, i32) {
    %c0_i32 = arith.constant 0 : i32
    %c0_i32_0 = arith.constant 0 : i32
    %c0_i32_1 = arith.constant 0 : i32
    return %c0_i32, %c0_i32_0 : i32, i32
  }
  func.func @transform_5(%arg0: i32) -> (i32, i32) {
    %c0_i32 = arith.constant 0 : i32
    %c0_i32_0 = arith.constant 0 : i32
    %c0_i32_1 = arith.constant 0 : i32
    return %c0_i32, %c0_i32_0 : i32, i32
  }
  func.func @transform_6(%arg0: i32) -> (i32, i32) {
    %c0_i32 = arith.constant 0 : i32
    %c0_i32_0 = arith.constant 0 : i32
    %c0_i32_1 = arith.constant 0 : i32
    return %c0_i32, %c0_i32_0 : i32, i32
  }
  func.func @transform_7(%arg0: i32) -> (i32, i32) {
    %c0_i32 = arith.constant 0 : i32
    %c0_i32_0 = arith.constant 0 : i32
    %c0_i32_1 = arith.constant 0 : i32
    return %c0_i32, %c0_i32_0 : i32, i32
  }
  func.func @transform_8(%arg0: i32) -> (i32, i32, i32) {
    %c0_i32 = arith.constant 0 : i32
    %c0_i32_0 = arith.constant 0 : i32
    %c0_i32_1 = arith.constant 0 : i32
    return %arg0, %c0_i32, %c0_i32_0 : i32, i32, i32
  }
  func.func @transform_9(%arg0: i32) -> (i32, i32, i32) {
    %c0_i32 = arith.constant 0 : i32
    %c0_i32_0 = arith.constant 0 : i32
    %c0_i32_1 = arith.constant 0 : i32
    return %arg0, %c0_i32, %c0_i32_0 : i32, i32, i32
  }
  func.func @transform_10(%arg0: i32) -> (i32, i32, i32) {
    %c0_i32 = arith.constant 0 : i32
    %c0_i32_0 = arith.constant 0 : i32
    %c0_i32_1 = arith.constant 0 : i32
    return %arg0, %c0_i32, %c0_i32_0 : i32, i32, i32
  }
  func.func @transform_11(%arg0: i32) -> (i32, i32, i32) {
    %c0_i32 = arith.constant 0 : i32
    %c0_i32_0 = arith.constant 0 : i32
    %c0_i32_1 = arith.constant 0 : i32
    return %arg0, %c0_i32, %c0_i32_0 : i32, i32, i32
  }
  func.func @transform_12(%arg0: i32) -> (i32, i32, i32) {
    %c0_i32 = arith.constant 0 : i32
    %c0_i32_0 = arith.constant 0 : i32
    %c0_i32_1 = arith.constant 0 : i32
    return %arg0, %c0_i32, %c0_i32_0 : i32, i32, i32
  }
  func.func @transform_13(%arg0: i32) -> (i32, i32) {
    %c0_i32 = arith.constant 0 : i32
    %c0_i32_0 = arith.constant 0 : i32
    %c0_i32_1 = arith.constant 0 : i32
    return %c0_i32, %c0_i32_0 : i32, i32
  }
}

</mosaic_0001>

<llo_original>
// kernel: bert_classifier_forward.1
$region0: #{bert_classifier_forward.1}
  #allocation0 [shape = 'u32[]', space=smem, size = 0x4, offset = 0x4, fixed_abs, tag = 'smem constant byte address 0x4 - core index']
  #allocation1 [shape = 'u32[144,128]{1,0:T(1,128)}', space=vmem, size = 0x12000, scoped, tag = 'internal scratch']
  #allocation2 [shape = 'f32[16,32]{1,0:T(8,128)}', space=vmem, size = 0x2000, scoped, tag = 'scratch operand']
  %s0 = inlined_call_operand.vmem [shape: s32[16,1], index: 0, kind: input, shape index: {}]
  %s1 = inlined_call_operand.vmem [shape: f32[2,1,8], index: 1, kind: input, shape index: {}]
  %s2 = inlined_call_operand.vmem [shape: f32[50,32], index: 2, kind: input, shape index: {}]
  %s3 = inlined_call_operand.hbm [shape: f32[16,32], index: 3, kind: input, shape index: {}]
  %s4 = inlined_call_operand.vmem [shape: f32[2,32], index: 4, kind: input, shape index: {}]
  %s5 = inlined_call_operand.hbm [shape: bf16[32,96], index: 5, kind: input, shape index: {}]
  %s6 = inlined_call_operand.vmem [shape: bf16[96,128], index: 6, kind: input, shape index: {}]
  %s7 = inlined_call_operand.vmem [shape: f32[2,128], index: 7, kind: input, shape index: {}]
  %s8 = inlined_call_operand.vmem [shape: bf16[2,32,96], index: 8, kind: input, shape index: {}]
  %s9 = inlined_call_operand.vmem [shape: bf16[2,32,32], index: 9, kind: input, shape index: {}]
  %s10 = inlined_call_operand.vmem [shape: bf16[2,32,64], index: 10, kind: input, shape index: {}]
  %s11 = inlined_call_operand.vmem [shape: bf16[2,64,32], index: 11, kind: input, shape index: {}]
  %s12 = inlined_call_operand.hbm [shape: f32[2,8,128], index: 12, kind: input, shape index: {}]
  %s13 = inlined_call_operand.vmem [shape: f32[2,128], index: 13, kind: output, shape index: {}]
  %s14 = sld [smem:[#allocation0]]
  $region105: #{bert_classifier_forward.1} parent=0
    _
  %s16 = ssub.s32 1, %s14
  %s17 = scalar_select 0, %s16, %s14
  $region1: #{bert_classifier_forward.1} parent=0
    #allocation3 [shape = 'u8[4096]{0}', space=vmem, size = 0x1000, scoped, tag = 'input window, operand 3, single buffered']
    #allocation4 [shape = 's32[2]{0}', space=sflag, size = 0x8, scoped, tag = 'scoped memory for bert_classifier_forward.1']
    #allocation5 [shape = 'u8[8192]{0}', space=vmem, size = 0x2000, scoped, tag = 'input window, operand 5, single buffered']
    #allocation6 [shape = 's32[1]{0}', space=sflag, size = 0x4, scoped, tag = 'scoped memory for bert_classifier_forward.1']
    #allocation7 [shape = 'u8[8192]{0}', space=vmem, size = 0x2000, scoped, tag = 'input window, operand 12']
    %18 = vsyncpa [#allocation4], 0
    %19 = vsyncpa [#allocation6], 0
    loop: start=0, step=1, limit=4
    $region2: #{bert_classifier_forward.1} parent=1 // loop_pre_header
      _
    $region3: #{bert_classifier_forward.1} parent=1 // loop_header
      %s21 = sphi 0, %s25
      %p22 = scmp.ge.s32.totalorder %s21, 4
      %s29 = sphi 0, %s29
      %s31 = sphi 0, %s29
      %s32 = sphi 0, %s31
      %s46 = sphi 0, %s32
      %s50 = sphi 0, %s50
      %s52 = sphi 0, %s50
      %s53 = sphi 0, %s52
      %s67 = sphi 0, %s53
      %s71 = sphi 0, %s71
      %s73 = sphi 0, %s71
      %s74 = sphi 0, %s73
      %s88 = sphi 0, %s74
      %s92 = sphi 0, %s92
      %s94 = sphi 0, %s92
      %s95 = sphi 0, %s94
      %s109 = sphi 0, %s95
      %s113 = sphi 0, %s113
      %s115 = sphi 0, %s113
      %s116 = sphi 0, %s115
      %s130 = sphi 0, %s116
      %s134 = sphi 0, %s134
      %s136 = sphi 0, %s134
      %s137 = sphi 0, %s136
      %s151 = sphi 0, %s137
      %s155 = sphi 0, %s155
      %s157 = sphi 0, %s155
      %s158 = sphi 0, %s157
      %s172 = sphi 0, %s158
      %s176 = sphi 0, %s176
      %s178 = sphi 0, %s176
      %s179 = sphi 0, %s178
      %s193 = sphi 0, %s179
      %s199 = sphi 0, %s201
      %s202 = sphi 0, %s199
      %s203 = sphi 0, %s202
      %s219 = sphi 0, %s203
      %s225 = sphi 0, %s227
      %s228 = sphi 0, %s225
      %s229 = sphi 0, %s228
      %s245 = sphi 0, %s229
      %s251 = sphi 0, %s253
      %s254 = sphi 0, %s251
      %s255 = sphi 0, %s254
      %s271 = sphi 0, %s255
      %s277 = sphi 0, %s279
      %s280 = sphi 0, %s277
      %s281 = sphi 0, %s280
      %s297 = sphi 0, %s281
      %s303 = sphi 0, %s305
      %s306 = sphi 0, %s303
      %s307 = sphi 0, %s306
      %s323 = sphi 0, %s307
      %s327 = sphi 0, %s327
      %s329 = sphi 0, %s327
      %s330 = sphi 0, %s329
      %s344 = sphi 0, %s330
    $region4: #{bert_classifier_forward.1} parent=1 // loop_header_branch
      %24 = sbr.rel (%p22) target = $region8
    $region5: #{bert_classifier_forward.1} parent=1 // loop_body
      %s26 = ssub.s32 %s21, 1
      %s27 = ssub.s32 %s21, 2
      %s28 = sadd.s32 %s21, 1
      %s30 = sadd.s32 %s29, 1
      %p33 = scmp.eq.s32.totalorder %s21, 1
      %p34 = scmp.ne.s32.totalorder %s29, %s31
      %p35 = scmp.eq.s32.totalorder %s21, 0
      %p36 = por %p34, %p35
      %p37 = scmp.ne.s32.totalorder %s29, %s31
      %p38 = scmp.eq.s32.totalorder %s26, 1
      %p39 = por %p37, %p38
      %p40 = scmp.ne.s32.totalorder %s31, %s32
      %p41 = scmp.eq.s32.totalorder %s26, 0
      %p42 = por %p40, %p41
      %p43 = scmp.ne.s32.totalorder %s31, %s32
      %p44 = scmp.eq.s32.totalorder %s27, 1
      %p45 = por %p43, %p44
      %p47 = scmp.ne.s32.totalorder %s32, %s46
      %p48 = scmp.eq.s32.totalorder %s27, 0
      %p49 = por %p47, %p48
      %s51 = sadd.s32 %s50, 1
      %p54 = scmp.eq.s32.totalorder %s21, 1
      %p55 = scmp.ne.s32.totalorder %s50, %s52
      %p56 = scmp.eq.s32.totalorder %s21, 0
      %p57 = por %p55, %p56
      %p58 = scmp.ne.s32.totalorder %s50, %s52
      %p59 = scmp.eq.s32.totalorder %s26, 1
      %p60 = por %p58, %p59
      %p61 = scmp.ne.s32.totalorder %s52, %s53
      %p62 = scmp.eq.s32.totalorder %s26, 0
      %p63 = por %p61, %p62
      %p64 = scmp.ne.s32.totalorder %s52, %s53
      %p65 = scmp.eq.s32.totalorder %s27, 1
      %p66 = por %p64, %p65
      %p68 = scmp.ne.s32.totalorder %s53, %s67
      %p69 = scmp.eq.s32.totalorder %s27, 0
      %p70 = por %p68, %p69
      %s72 = sadd.s32 %s71, 1
      %p75 = scmp.eq.s32.totalorder %s21, 1
      %p76 = scmp.ne.s32.totalorder %s71, %s73
      %p77 = scmp.eq.s32.totalorder %s21, 0
      %p78 = por %p76, %p77
      %p79 = scmp.ne.s32.totalorder %s71, %s73
      %p80 = scmp.eq.s32.totalorder %s26, 1
      %p81 = por %p79, %p80
      %p82 = scmp.ne.s32.totalorder %s73, %s74
      %p83 = scmp.eq.s32.totalorder %s26, 0
      %p84 = por %p82, %p83
      %p85 = scmp.ne.s32.totalorder %s73, %s74
      %p86 = scmp.eq.s32.totalorder %s27, 1
      %p87 = por %p85, %p86
      %p89 = scmp.ne.s32.totalorder %s74, %s88
      %p90 = scmp.eq.s32.totalorder %s27, 0
      %p91 = por %p89, %p90
      %s93 = sadd.s32 %s92, 1
      %p96 = scmp.eq.s32.totalorder %s21, 1
      %p97 = scmp.ne.s32.totalorder %s92, %s94
      %p98 = scmp.eq.s32.totalorder %s21, 0
      %p99 = por %p97, %p98
      %p100 = scmp.ne.s32.totalorder %s92, %s94
      %p101 = scmp.eq.s32.totalorder %s26, 1
      %p102 = por %p100, %p101
      %p103 = scmp.ne.s32.totalorder %s94, %s95
      %p104 = scmp.eq.s32.totalorder %s26, 0
      %p105 = por %p103, %p104
      %p106 = scmp.ne.s32.totalorder %s94, %s95
      %p107 = scmp.eq.s32.totalorder %s27, 1
      %p108 = por %p106, %p107
      %p110 = scmp.ne.s32.totalorder %s95, %s109
      %p111 = scmp.eq.s32.totalorder %s27, 0
      %p112 = por %p110, %p111
      %s114 = sadd.s32 %s113, 1
      %p117 = scmp.eq.s32.totalorder %s21, 1
      %p118 = scmp.ne.s32.totalorder %s113, %s115
      %p119 = scmp.eq.s32.totalorder %s21, 0
      %p120 = por %p118, %p119
      %p121 = scmp.ne.s32.totalorder %s113, %s115
      %p122 = scmp.eq.s32.totalorder %s26, 1
      %p123 = por %p121, %p122
      %p124 = scmp.ne.s32.totalorder %s115, %s116
      %p125 = scmp.eq.s32.totalorder %s26, 0
      %p126 = por %p124, %p125
      %p127 = scmp.ne.s32.totalorder %s115, %s116
      %p128 = scmp.eq.s32.totalorder %s27, 1
      %p129 = por %p127, %p128
      %p131 = scmp.ne.s32.totalorder %s116, %s130
      %p132 = scmp.eq.s32.totalorder %s27, 0
      %p133 = por %p131, %p132
      %s135 = sadd.s32 %s134, 1
      %p138 = scmp.eq.s32.totalorder %s21, 1
      %p139 = scmp.ne.s32.totalorder %s134, %s136
      %p140 = scmp.eq.s32.totalorder %s21, 0
      %p141 = por %p139, %p140
      %p142 = scmp.ne.s32.totalorder %s134, %s136
      %p143 = scmp.eq.s32.totalorder %s26, 1
      %p144 = por %p142, %p143
      %p145 = scmp.ne.s32.totalorder %s136, %s137
      %p146 = scmp.eq.s32.totalorder %s26, 0
      %p147 = por %p145, %p146
      %p148 = scmp.ne.s32.totalorder %s136, %s137
      %p149 = scmp.eq.s32.totalorder %s27, 1
      %p150 = por %p148, %p149
      %p152 = scmp.ne.s32.totalorder %s137, %s151
      %p153 = scmp.eq.s32.totalorder %s27, 0
      %p154 = por %p152, %p153
      %s156 = sadd.s32 %s155, 1
      %p159 = scmp.eq.s32.totalorder %s21, 1
      %p160 = scmp.ne.s32.totalorder %s155, %s157
      %p161 = scmp.eq.s32.totalorder %s21, 0
      %p162 = por %p160, %p161
      %p163 = scmp.ne.s32.totalorder %s155, %s157
      %p164 = scmp.eq.s32.totalorder %s26, 1
      %p165 = por %p163, %p164
      %p166 = scmp.ne.s32.totalorder %s157, %s158
      %p167 = scmp.eq.s32.totalorder %s26, 0
      %p168 = por %p166, %p167
      %p169 = scmp.ne.s32.totalorder %s157, %s158
      %p170 = scmp.eq.s32.totalorder %s27, 1
      %p171 = por %p169, %p170
      %p173 = scmp.ne.s32.totalorder %s158, %s172
      %p174 = scmp.eq.s32.totalorder %s27, 0
      %p175 = por %p173, %p174
      %s177 = sadd.s32 %s176, 1
      %p180 = scmp.eq.s32.totalorder %s21, 1
      %p181 = scmp.ne.s32.totalorder %s176, %s178
      %p182 = scmp.eq.s32.totalorder %s21, 0
      %p183 = por %p181, %p182
      %p184 = scmp.ne.s32.totalorder %s176, %s178
      %p185 = scmp.eq.s32.totalorder %s26, 1
      %p186 = por %p184, %p185
      %p187 = scmp.ne.s32.totalorder %s178, %s179
      %p188 = scmp.eq.s32.totalorder %s26, 0
      %p189 = por %p187, %p188
      %p190 = scmp.ne.s32.totalorder %s178, %s179
      %p191 = scmp.eq.s32.totalorder %s27, 1
      %p192 = por %p190, %p191
      %p194 = scmp.ne.s32.totalorder %s179, %s193
      %p195 = scmp.eq.s32.totalorder %s27, 0
      %p196 = por %p194, %p195
      %s197 = ssub.s32 %s21, %s28
      %p198 = scmp.eq.s32.totalorder %s197, 0
      %s200 = sadd.s32 %s199, 1
      %s201 = scalar_select %p198, %s199, %s200
      %p204 = pneg %p198
      %p205 = scmp.eq.s32.totalorder %s21, 1
      %p206 = por %p204, %p205
      %p207 = scmp.ne.s32.totalorder %s199, %s202
      %p208 = scmp.eq.s32.totalorder %s21, 0
      %p209 = por %p207, %p208
      %p210 = scmp.ne.s32.totalorder %s199, %s202
      %p211 = scmp.eq.s32.totalorder %s26, 1
      %p212 = por %p210, %p211
      %p213 = scmp.ne.s32.totalorder %s202, %s203
      %p214 = scmp.eq.s32.totalorder %s26, 0
      %p215 = por %p213, %p214
      %p216 = scmp.ne.s32.totalorder %s202, %s203
      %p217 = scmp.eq.s32.totalorder %s27, 1
      %p218 = por %p216, %p217
      %p220 = scmp.ne.s32.totalorder %s203, %s219
      %p221 = scmp.eq.s32.totalorder %s27, 0
      %p222 = por %p220, %p221
      %s223 = ssub.s32 %s21, %s28
      %p224 = scmp.eq.s32.totalorder %s223, 0
      %s226 = sadd.s32 %s225, 1
      %s227 = scalar_select %p224, %s225, %s226
      %p230 = pneg %p224
      %p231 = scmp.eq.s32.totalorder %s21, 1
      %p232 = por %p230, %p231
      %p233 = scmp.ne.s32.totalorder %s225, %s228
      %p234 = scmp.eq.s32.totalorder %s21, 0
      %p235 = por %p233, %p234
      %p236 = scmp.ne.s32.totalorder %s225, %s228
      %p237 = scmp.eq.s32.totalorder %s26, 1
      %p238 = por %p236, %p237
      %p239 = scmp.ne.s32.totalorder %s228, %s229
      %p240 = scmp.eq.s32.totalorder %s26, 0
      %p241 = por %p239, %p240
      %p242 = scmp.ne.s32.totalorder %s228, %s229
      %p243 = scmp.eq.s32.totalorder %s27, 1
      %p244 = por %p242, %p243
      %p246 = scmp.ne.s32.totalorder %s229, %s245
      %p247 = scmp.eq.s32.totalorder %s27, 0
      %p248 = por %p246, %p247
      %s249 = ssub.s32 %s21, %s28
      %p250 = scmp.eq.s32.totalorder %s249, 0
      %s252 = sadd.s32 %s251, 1
      %s253 = scalar_select %p250, %s251, %s252
      %p256 = pneg %p250
      %p257 = scmp.eq.s32.totalorder %s21, 1
      %p258 = por %p256, %p257
      %p259 = scmp.ne.s32.totalorder %s251, %s254
      %p260 = scmp.eq.s32.totalorder %s21, 0
      %p261 = por %p259, %p260
      %p262 = scmp.ne.s32.totalorder %s251, %s254
      %p263 = scmp.eq.s32.totalorder %s26, 1
      %p264 = por %p262, %p263
      %p265 = scmp.ne.s32.totalorder %s254, %s255
      %p266 = scmp.eq.s32.totalorder %s26, 0
      %p267 = por %p265, %p266
      %p268 = scmp.ne.s32.totalorder %s254, %s255
      %p269 = scmp.eq.s32.totalorder %s27, 1
      %p270 = por %p268, %p269
      %p272 = scmp.ne.s32.totalorder %s255, %s271
      %p273 = scmp.eq.s32.totalorder %s27, 0
      %p274 = por %p272, %p273
      %s275 = ssub.s32 %s21, %s28
      %p276 = scmp.eq.s32.totalorder %s275, 0
      %s278 = sadd.s32 %s277, 1
      %s279 = scalar_select %p276, %s277, %s278
      %p282 = pneg %p276
      %p283 = scmp.eq.s32.totalorder %s21, 1
      %p284 = por %p282, %p283
      %p285 = scmp.ne.s32.totalorder %s277, %s280
      %p286 = scmp.eq.s32.totalorder %s21, 0
      %p287 = por %p285, %p286
      %p288 = scmp.ne.s32.totalorder %s277, %s280
      %p289 = scmp.eq.s32.totalorder %s26, 1
      %p290 = por %p288, %p289
      %p291 = scmp.ne.s32.totalorder %s280, %s281
      %p292 = scmp.eq.s32.totalorder %s26, 0
      %p293 = por %p291, %p292
      %p294 = scmp.ne.s32.totalorder %s280, %s281
      %p295 = scmp.eq.s32.totalorder %s27, 1
      %p296 = por %p294, %p295
      %p298 = scmp.ne.s32.totalorder %s281, %s297
      %p299 = scmp.eq.s32.totalorder %s27, 0
      %p300 = por %p298, %p299
      %s301 = ssub.s32 %s21, %s28
      %p302 = scmp.eq.s32.totalorder %s301, 0
      %s304 = sadd.s32 %s303, 1
      %s305 = scalar_select %p302, %s303, %s304
      %p308 = pneg %p302
      %p309 = scmp.eq.s32.totalorder %s21, 1
      %p310 = por %p308, %p309
      %p311 = scmp.ne.s32.totalorder %s303, %s306
      %p312 = scmp.eq.s32.totalorder %s21, 0
      %p313 = por %p311, %p312
      %p314 = scmp.ne.s32.totalorder %s303, %s306
      %p315 = scmp.eq.s32.totalorder %s26, 1
      %p316 = por %p314, %p315
      %p317 = scmp.ne.s32.totalorder %s306, %s307
      %p318 = scmp.eq.s32.totalorder %s26, 0
      %p319 = por %p317, %p318
      %p320 = scmp.ne.s32.totalorder %s306, %s307
      %p321 = scmp.eq.s32.totalorder %s27, 1
      %p322 = por %p320, %p321
      %p324 = scmp.ne.s32.totalorder %s307, %s323
      %p325 = scmp.eq.s32.totalorder %s27, 0
      %p326 = por %p324, %p325
      %s328 = sadd.s32 %s327, 1
      %p331 = scmp.eq.s32.totalorder %s21, 1
      %p332 = scmp.ne.s32.totalorder %s327, %s329
      %p333 = scmp.eq.s32.totalorder %s21, 0
      %p334 = por %p332, %p333
      %p335 = scmp.ne.s32.totalorder %s327, %s329
      %p336 = scmp.eq.s32.totalorder %s26, 1
      %p337 = por %p335, %p336
      %p338 = scmp.ne.s32.totalorder %s329, %s330
      %p339 = scmp.eq.s32.totalorder %s26, 0
      %p340 = por %p338, %p339
      %p341 = scmp.ne.s32.totalorder %s329, %s330
      %p342 = scmp.eq.s32.totalorder %s27, 1
      %p343 = por %p341, %p342
      %p345 = scmp.ne.s32.totalorder %s330, %s344
      %p346 = scmp.eq.s32.totalorder %s27, 0
      %p347 = por %p345, %p346
      %p348 = scmp.le.s32.totalorder 1, %s21
      %p349 = scmp.lt.s32.totalorder %s21, 3
      %p350 = pnand %p348, %p349
      %p351 = pneg %p350
      // Predicated region
      $region9: #{bert_classifier_forward.1} parent=5 // pred_check
        _
      $region10: #{bert_classifier_forward.1} parent=5 // pred_check_branch
        %353 = sbr.rel (%p350) target = $region12
      $region11: #{bert_classifier_forward.1} parent=5 // pred_region
        %s354 = ssub.s32 %s21, 1
        // Predicated region
        $region13: #{bert_classifier_forward.1} parent=11 // pred_check
          %p355 = pneg %p42
        $region14: #{bert_classifier_forward.1} parent=11 // pred_check_branch
          %357 = sbr.rel (%p355) target = $region16
        $region15: #{bert_classifier_forward.1} parent=11 // pred_region
          _
        $region16: #{bert_classifier_forward.1} parent=11 // pred_fallthru
          _
        // Predicated region
        $region17: #{bert_classifier_forward.1} parent=11 // pred_check
          %p358 = pneg %p63
        $region18: #{bert_classifier_forward.1} parent=11 // pred_check_branch
          %360 = sbr.rel (%p358) target = $region20
        $region19: #{bert_classifier_forward.1} parent=11 // pred_region
          _
        $region20: #{bert_classifier_forward.1} parent=11 // pred_fallthru
          _
        // Predicated region
        $region21: #{bert_classifier_forward.1} parent=11 // pred_check
          %p361 = pneg %p84
        $region22: #{bert_classifier_forward.1} parent=11 // pred_check_branch
          %363 = sbr.rel (%p361) target = $region24
        $region23: #{bert_classifier_forward.1} parent=11 // pred_region
          _
        $region24: #{bert_classifier_forward.1} parent=11 // pred_fallthru
          _
        // Predicated region
        $region25: #{bert_classifier_forward.1} parent=11 // pred_check
          %p364 = pneg %p105
        $region26: #{bert_classifier_forward.1} parent=11 // pred_check_branch
          %366 = sbr.rel (%p364) target = $region28
        $region27: #{bert_classifier_forward.1} parent=11 // pred_region
          %s368 = ssub.s32 128, 128
          %369 = vsyncadd [#allocation4], %s368
          %s371 = sshll.u32 [#allocation3], 4
          %s372 = int_to_ptr.vmem [resolvable:$true] %s371
          %374 = dma.hbm_to_vmem [thread:$0]  %s3, 128, %s372, [#allocation4]
        $region28: #{bert_classifier_forward.1} parent=11 // pred_fallthru
          _
        // Predicated region
        $region29: #{bert_classifier_forward.1} parent=11 // pred_check
          %p375 = pneg %p126
        $region30: #{bert_classifier_forward.1} parent=11 // pred_check_branch
          %377 = sbr.rel (%p375) target = $region32
        $region31: #{bert_classifier_forward.1} parent=11 // pred_region
          _
        $region32: #{bert_classifier_forward.1} parent=11 // pred_fallthru
          _
        // Predicated region
        $region33: #{bert_classifier_forward.1} parent=11 // pred_check
          %p378 = pneg %p147
        $region34: #{bert_classifier_forward.1} parent=11 // pred_check_branch
          %380 = sbr.rel (%p378) target = $region36
        $region35: #{bert_classifier_forward.1} parent=11 // pred_region
          %s382 = ssub.s32 256, 256
          %383 = vsyncadd [#allocation6], %s382
          %s384 = sshll.u32 [#allocation5], 4
          %s385 = int_to_ptr.vmem [resolvable:$true] %s384
          %390 = dma.hbm_to_vmem [thread:$0]  %s5, 256, %s385, [#allocation6], 64, 64, 4
        $region36: #{bert_classifier_forward.1} parent=11 // pred_fallthru
          _
        // Predicated region
        $region37: #{bert_classifier_forward.1} parent=11 // pred_check
          %p391 = pneg %p168
        $region38: #{bert_classifier_forward.1} parent=11 // pred_check_branch
          %393 = sbr.rel (%p391) target = $region40
        $region39: #{bert_classifier_forward.1} parent=11 // pred_region
          _
        $region40: #{bert_classifier_forward.1} parent=11 // pred_fallthru
          _
        // Predicated region
        $region41: #{bert_classifier_forward.1} parent=11 // pred_check
          %p394 = pneg %p189
        $region42: #{bert_classifier_forward.1} parent=11 // pred_check_branch
          %396 = sbr.rel (%p394) target = $region44
        $region43: #{bert_classifier_forward.1} parent=11 // pred_region
          _
        $region44: #{bert_classifier_forward.1} parent=11 // pred_fallthru
          _
      $region12: #{bert_classifier_forward.1} parent=5 // pred_fallthru
        _
      %p397 = scmp.lt.s32.totalorder %s21, 2
      // Predicated region
      $region45: #{bert_classifier_forward.1} parent=5 // pred_check
        %p398 = pneg %p397
      $region46: #{bert_classifier_forward.1} parent=5 // pred_check_branch
        %400 = sbr.rel (%p398) target = $region48
      $region47: #{bert_classifier_forward.1} parent=5 // pred_region
        // Predicated region
        $region49: #{bert_classifier_forward.1} parent=47 // pred_check
          %p401 = pneg %p209
        $region50: #{bert_classifier_forward.1} parent=47 // pred_check_branch
          %403 = sbr.rel (%p401) target = $region52
        $region51: #{bert_classifier_forward.1} parent=47 // pred_region
          %p404 = scmp.lt.s32.totalorder %s21, 1
          %s405 = scalar_select %p404, %s21, 1
          %s406 = smul.addr %s405, 4
          %s407 = smul.addr %s406, 4
          %s408 = scalar_lea.vmem %s8, %s407
        $region52: #{bert_classifier_forward.1} parent=47 // pred_fallthru
          _
        // Predicated region
        $region53: #{bert_classifier_forward.1} parent=47 // pred_check
          %p409 = pneg %p235
        $region54: #{bert_classifier_forward.1} parent=47 // pred_check_branch
          %411 = sbr.rel (%p409) target = $region56
        $region55: #{bert_classifier_forward.1} parent=47 // pred_region
          %p412 = scmp.lt.s32.totalorder %s21, 1
          %s413 = scalar_select %p412, %s21, 1
          %s414 = smul.addr %s413, 4
          %s415 = smul.addr %s414, 4
          %s416 = scalar_lea.vmem %s9, %s415
        $region56: #{bert_classifier_forward.1} parent=47 // pred_fallthru
          _
        // Predicated region
        $region57: #{bert_classifier_forward.1} parent=47 // pred_check
          %p417 = pneg %p261
        $region58: #{bert_classifier_forward.1} parent=47 // pred_check_branch
          %419 = sbr.rel (%p417) target = $region60
        $region59: #{bert_classifier_forward.1} parent=47 // pred_region
          %p420 = scmp.lt.s32.totalorder %s21, 1
          %s421 = scalar_select %p420, %s21, 1
          %s422 = smul.addr %s421, 4
          %s423 = smul.addr %s422, 4
          %s424 = scalar_lea.vmem %s10, %s423
        $region60: #{bert_classifier_forward.1} parent=47 // pred_fallthru
          _
        // Predicated region
        $region61: #{bert_classifier_forward.1} parent=47 // pred_check
          %p425 = pneg %p287
        $region62: #{bert_classifier_forward.1} parent=47 // pred_check_branch
          %427 = sbr.rel (%p425) target = $region64
        $region63: #{bert_classifier_forward.1} parent=47 // pred_region
          %p428 = scmp.lt.s32.totalorder %s21, 1
          %s429 = scalar_select %p428, %s21, 1
          %s430 = smul.addr %s429, 8
          %s431 = smul.addr %s430, 4
          %s432 = scalar_lea.vmem %s11, %s431
        $region64: #{bert_classifier_forward.1} parent=47 // pred_fallthru
          _
        // Predicated region
        $region65: #{bert_classifier_forward.1} parent=47 // pred_check
          %p433 = pneg %p313
        $region66: #{bert_classifier_forward.1} parent=47 // pred_check_branch
          %435 = sbr.rel (%p433) target = $region68
        $region67: #{bert_classifier_forward.1} parent=47 // pred_region
          %s436 = sand.u32 %s21, 1
          %s437 = scalar_lea.sflag [#allocation4], %s436
          %s438 = sand.u32 %s303, 1
          %s439 = smul.addr %s438, 8
          %s440 = scalar_lea.vmem [#allocation7], %s439
          %s442 = ssub.s32 128, 128
          %443 = vsyncadd %s437, %s442
          %s444 = smul.addr %s21, 128
          %s445 = scalar_lea.hbm %s12, %s444
          %s447 = sshll.u32 %s440, 4
          %s448 = int_to_ptr.vmem [resolvable:$true] %s447
          %450 = dma.hbm_to_vmem [thread:$0]  %s445, 128, %s448, %s437
        $region68: #{bert_classifier_forward.1} parent=47 // pred_fallthru
          _
      $region48: #{bert_classifier_forward.1} parent=5 // pred_fallthru
        _
      %p451 = scmp.le.s32.totalorder 1, %s21
      %p452 = scmp.lt.s32.totalorder %s21, 3
      %p453 = pnand %p451, %p452
      %p454 = pneg %p453
      // Predicated region
      $region69: #{bert_classifier_forward.1} parent=5 // pred_check
        _
      $region70: #{bert_classifier_forward.1} parent=5 // pred_check_branch
        %456 = sbr.rel (%p453) target = $region72
      $region71: #{bert_classifier_forward.1} parent=5 // pred_region
        %s457 = ssub.s32 %s21, 1
        // Predicated region
        $region73: #{bert_classifier_forward.1} parent=71 // pred_check
          %p458 = pneg %p105
        $region74: #{bert_classifier_forward.1} parent=71 // pred_check_branch
          %460 = sbr.rel (%p458) target = $region76
        $region75: #{bert_classifier_forward.1} parent=71 // pred_region
          %461 = dma.done [#allocation4], 128
        $region76: #{bert_classifier_forward.1} parent=71 // pred_fallthru
          _
        // Predicated region
        $region77: #{bert_classifier_forward.1} parent=71 // pred_check
          %p462 = pneg %p147
        $region78: #{bert_classifier_forward.1} parent=71 // pred_check_branch
          %464 = sbr.rel (%p462) target = $region80
        $region79: #{bert_classifier_forward.1} parent=71 // pred_region
          %465 = dma.done [#allocation6], 256
        $region80: #{bert_classifier_forward.1} parent=71 // pred_fallthru
          _
        %s466 = sand.u32 %s26, 1
        %s467 = scalar_lea.sflag [#allocation4], %s466
        %s468 = sand.u32 %s306, 1
        %s469 = smul.addr %s468, 8
        %s470 = scalar_lea.vmem [#allocation7], %s469
        // Predicated region
        $region81: #{bert_classifier_forward.1} parent=71 // pred_check
          %p471 = pneg %p319
        $region82: #{bert_classifier_forward.1} parent=71 // pred_check_branch
          %473 = sbr.rel (%p471) target = $region84
        $region83: #{bert_classifier_forward.1} parent=71 // pred_region
          %474 = dma.done %s467, 128
        $region84: #{bert_classifier_forward.1} parent=71 // pred_fallthru
          _
        %p475 = pneg %p42
        %p476 = pneg %p39
        %p477 = pneg %p63
        %p478 = pneg %p60
        %p479 = pneg %p84
        %p480 = pneg %p81
        %p481 = pneg %p105
        %p482 = pneg %p102
        %p483 = pneg %p126
        %p484 = pneg %p123
        %p485 = pneg %p147
        %p486 = pneg %p144
        %p487 = pneg %p168
        %p488 = pneg %p165
        %p489 = pneg %p189
        %p490 = pneg %p186
        %p491 = scmp.lt.s32.totalorder %s26, 1
        %s492 = scalar_select %p491, %s26, 1
        %s493 = smul.addr %s492, 4
        %s494 = smul.addr %s493, 4
        %s495 = scalar_lea.vmem %s8, %s494
        %p496 = pneg %p215
        %p497 = pneg %p212
        %p498 = scmp.lt.s32.totalorder %s26, 1
        %s499 = scalar_select %p498, %s26, 1
        %s500 = smul.addr %s499, 4
        %s501 = smul.addr %s500, 4
        %s502 = scalar_lea.vmem %s9, %s501
        %p503 = pneg %p241
        %p504 = pneg %p238
        %p505 = scmp.lt.s32.totalorder %s26, 1
        %s506 = scalar_select %p505, %s26, 1
        %s507 = smul.addr %s506, 4
        %s508 = smul.addr %s507, 4
        %s509 = scalar_lea.vmem %s10, %s508
        %p510 = pneg %p267
        %p511 = pneg %p264
        %p512 = scmp.lt.s32.totalorder %s26, 1
        %s513 = scalar_select %p512, %s26, 1
        %s514 = smul.addr %s513, 8
        %s515 = smul.addr %s514, 4
        %s516 = scalar_lea.vmem %s11, %s515
        %p517 = pneg %p293
        %p518 = pneg %p290
        %s519 = sand.u32 %s26, 1
        %s520 = scalar_lea.sflag [#allocation4], %s519
        %s521 = sand.u32 %s306, 1
        %s522 = smul.addr %s521, 8
        %s523 = scalar_lea.vmem [#allocation7], %s522
        %p524 = pneg %p319
        %p525 = pneg %p316
        %p526 = pneg %p340
        %p527 = pneg %p337
        %p528 = scmp.lt.s32.totalorder %s26, 1
        %s529 = scalar_select %p528, %s26, 1
        %s530 = smul.addr %s529, 4
        %s531 = smul.addr %s530, 4
        %s532 = scalar_lea.vmem %s8, %s531
        %p533 = scmp.lt.s32.totalorder %s26, 1
        %s534 = scalar_select %p533, %s26, 1
        %s535 = smul.addr %s534, 4
        %s536 = smul.addr %s535, 4
        %s537 = scalar_lea.vmem %s9, %s536
        %p538 = scmp.lt.s32.totalorder %s26, 1
        %s539 = scalar_select %p538, %s26, 1
        %s540 = smul.addr %s539, 4
        %s541 = smul.addr %s540, 4
        %s542 = scalar_lea.vmem %s10, %s541
        %p543 = scmp.lt.s32.totalorder %s26, 1
        %s544 = scalar_select %p543, %s26, 1
        %s545 = smul.addr %s544, 8
        %s546 = smul.addr %s545, 4
        %s547 = scalar_lea.vmem %s11, %s546
        %p549 = scmp.eq.s32.totalorder %s26, 0
        // Predicated region
        $region85: #{bert_classifier_forward.1} parent=71 // pred_check
          %p550 = pneg %p549
        $region86: #{bert_classifier_forward.1} parent=71 // pred_check_branch
          %552 = sbr.rel (%p550) target = $region88
        $region87: #{bert_classifier_forward.1} parent=71 // pred_region
          %v553 = vlaneseq
          %v554 = vand.u32 %v553, 127
          %v555 = vld [vmem:[%s0] sm:$0xff]
          %v556 = vld [vmem:[%s0 + $0x8] sm:$0xff]
          %557 = vset.pattern.permute.xlu0 0
          %558 = vperm.xlu0 %557, %v555
          %v559 = vpop.permute.xlu0 %558
          %560 = vset.pattern.permute.xlu0 0
          %561 = vperm.xlu0 %560, %v556
          %v562 = vpop.permute.xlu0 %561
          %vm563 = vcmp.eq.s32.totalorder %v554, %v559
          %vm564 = vcmp.eq.s32.totalorder %v554, %v562
          %v565 = vsel %vm563, 1, 0
          %v566 = vsel %vm564, 1, 0
          %v567 = vcvt.s32.f32 %v565
          %v568 = vcvt.s32.f32 %v566
          %v569 = vld [vmem:[%s2] sm:$0xff]
          %v570 = vld [vmem:[%s2 + $0x8] sm:$0xff]
          %v571 = vld [vmem:[%s2 + $0x10] sm:$0xff]
          %v572 = vld [vmem:[%s2 + $0x18] sm:$0xff]
          %v573 = vld [vmem:[%s2 + $0x20] sm:$0xff]
          %v574 = vld [vmem:[%s2 + $0x28] sm:$0xff]
          %v575 = vld [vmem:[%s2 + $0x30] sm:$0x3]
          %v576 = vld [vmem:[#allocation3] sm:$0xff]
          %vm577 = vcmask 408576
          %v579 = vsel %vm577, %v567, 0
          %v582 = vsel %vm577, %v568, 0
          %vm584 = vcmask 1041408
          %v586 = vsel %vm584, %v575, 0
          %588 = vmatprep.subr.mxu0 0.0
          %589 = vmatpush1.msra.mxu0 %v569
          %590 = vmatprep.subr.mxu0 0.0
          %591 = vmatpush1.msra.mxu0 %v570
          %592 = vmatprep.subr.mxu0 0.0
          %593 = vmatpush1.msra.mxu0 %v571
          %594 = vmatprep.subr.mxu0 0.0
          %595 = vmatpush1.msra.mxu0 %v572
          %596 = vmatprep.subr.mxu0 0.0
          %597 = vmatpush1.msra.mxu0 %v573
          %598 = vmatprep.subr.mxu0 0.0
          %599 = vmatpush1.msra.mxu0 %v574
          %600 = vmatprep.subr.mxu0 0.0
          %601 = vmatpush1.msra.mxu0 %v586
          %602 = vmatprep.subr.mxu0 0.0
          %603 = vmatpush1.msra.mxu0 0.0
          %604 = vmatprep.subr.mxu0 0.0
          %605 = vmatpush1.msra.mxu0 0.0
          %606 = vmatprep.subr.mxu0 0.0
          %607 = vmatpush1.msra.mxu0 0.0
          %608 = vmatprep.subr.mxu0 0.0
          %609 = vmatpush1.msra.mxu0 0.0
          %610 = vmatprep.subr.mxu0 0.0
          %611 = vmatpush1.msra.mxu0 0.0
          %612 = vmatprep.subr.mxu0 0.0
          %613 = vmatpush1.msra.mxu0 0.0
          %614 = vmatprep.subr.mxu0 0.0
          %615 = vmatpush1.msra.mxu0 0.0
          %616 = vmatprep.subr.mxu0 0.0
          %617 = vmatpush1.msra.mxu0 0.0
          %618 = vmatprep.subr.mxu0 0.0
          %619 = vmatpush1.msra.mxu0 0.0
          %620 = vmatprep.subr.mxu0 0.0
          %621 = vmatpush1.msra.mxu0 0.0
          %622 = vmatprep.subr.mxu0 0.0
          %623 = vmatpush1.msra.mxu0 0.0
          %624 = vmatprep.subr.mxu0 0.0
          %625 = vmatpush1.msra.mxu0 0.0
          %626 = vmatprep.subr.mxu0 0.0
          %627 = vmatpush1.msra.mxu0 0.0
          %628 = vmatprep.subr.mxu0 0.0
          %629 = vmatpush1.msra.mxu0 0.0
          %630 = vmatprep.subr.mxu0 0.0
          %631 = vmatpush1.msra.mxu0 0.0
          %632 = vmatprep.subr.mxu0 0.0
          %633 = vmatpush1.msra.mxu0 0.0
          %634 = vmatprep.subr.mxu0 0.0
          %635 = vmatpush1.msra.mxu0 0.0
          %636 = vmatprep.subr.mxu0 0.0
          %637 = vmatpush1.msra.mxu0 0.0
          %638 = vmatprep.subr.mxu0 0.0
          %639 = vmatpush1.msra.mxu0 0.0
          %640 = vmatprep.subr.mxu0 0.0
          %641 = vmatpush1.msra.mxu0 0.0
          %642 = vmatprep.subr.mxu0 0.0
          %643 = vmatpush1.msra.mxu0 0.0
          %644 = vmatprep.subr.mxu0 0.0
          %645 = vmatpush1.msra.mxu0 0.0
          %646 = vmatprep.subr.mxu0 0.0
          %647 = vmatpush1.msra.mxu0 0.0
          %648 = vmatprep.subr.mxu0 0.0
          %649 = vmatpush1.msra.mxu0 0.0
          %650 = vmatprep.subr.mxu0 0.0
          %651 = vmatpush1.msra.mxu0 0.0
          %652 = vmatprep.mubr.f32.mxu0 0.0
          %653 = vmatmul.mubr.f32.gmra.mrb[0].mxu0 %v579
          %v654 = vpop.f32.mrb[0].mxu0
          %v655 = vadd.f32 %v576, %v654
          %v656 = vpop.f32.mrb[0].mxu0
          %657 = vmatprep.mubr.f32.mxu0 0.0
          %658 = vmatmul.mubr.f32.gmra.mrb[0].mxu0 %v582
          %v659 = vpop.f32.mrb[0].mxu0
          %v660 = vadd.f32 %v576, %v659
          %v661 = vpop.f32.mrb[0].mxu0
          %662 = vdwg.mxu0
          %v663 = vld [vmem:[%s4] sm:$0x1]
          %v664 = vld [vmem:[%s4 + $0x1] sm:$0x1]
          %vm665 = vcmask 261120
          %v666 = vsel %vm665, %v655, 0.0
          %667 = vadd.xlane.f32.xlu0 %v666
          %v668 = vpop.xlane.xlu0 %667
          %v669 = vsel %vm665, %v660, 0.0
          %670 = vadd.xlane.f32.xlu0 %v669
          %v671 = vpop.xlane.xlu0 %670
          %v672 = vrcp.pop 32.0
          %v673 = vmul.f32 %v668, %v672
          %v674 = vmul.f32 %v671, %v672
          %v675 = vsub.f32 %v655, %v673
          %v676 = vsub.f32 %v660, %v674
          %v677 = vmul.f32 %v675, %v675
          %v678 = vmul.f32 %v676, %v676
          %v679 = vsel %vm665, %v677, 0.0
          %680 = vadd.xlane.f32.xlu0 %v679
          %v681 = vpop.xlane.xlu0 %680
          %v682 = vsel %vm665, %v678, 0.0
          %683 = vadd.xlane.f32.xlu0 %v682
          %v684 = vpop.xlane.xlu0 %683
          %v685 = vmul.f32 %v681, %v672
          %v686 = vmul.f32 %v684, %v672
          %v687 = vadd.f32 %v685, 1e-12
          %v688 = vadd.f32 %v686, 1e-12
          %v689 = vrsqrt.pop %v687
          %v690 = vrsqrt.pop %v688
          %v691 = vmul.f32 %v675, %v689
          %v692 = vmul.f32 %v676, %v690
          %v693 = vlaneseq
          %v694 = vshrl.u32 %v693, 7
          %v695 = vsub.s32 0, %v694
          %v696 = vrot.slane %v663, %v695
          %v697 = vmul.f32 %v691, %v696
          %v698 = vmul.f32 %v692, %v696
          %v699 = vlaneseq
          %v700 = vshrl.u32 %v699, 7
          %v701 = vsub.s32 0, %v700
          %v702 = vrot.slane %v664, %v701
          %v703 = vadd.f32 %v697, %v702
          %v704 = vadd.f32 %v698, %v702
          %705 = vst.msk [vmem:[#allocation2] sm:$0xff] %vm665, %v703
          %706 = vst.msk [vmem:[#allocation2 + $0x8] sm:$0xff] %vm665, %v704
        $region88: #{bert_classifier_forward.1} parent=71 // pred_fallthru
          _
        %v707 = vld [vmem:[#allocation2] sm:$0xff]
        %v708 = vld [vmem:[#allocation2 + $0x8] sm:$0xff]
        %v709 = vpack.c.bf16 %v708, %v707
        %v710 = vld [vmem:[%s470] sm:$0x1]
        %v711 = vld [vmem:[%s470 + $0x1] sm:$0x1]
        %v712 = vld [vmem:[%s470 + $0x2] sm:$0x1]
        %v713 = vld [vmem:[%s470 + $0x3] sm:$0x1]
        %v714 = vld [vmem:[%s470 + $0x4] sm:$0x1]
        %v715 = vld [vmem:[%s470 + $0x5] sm:$0x1]
        %v716 = vld [vmem:[%s470 + $0x6] sm:$0x1]
        %v717 = vld [vmem:[%s470 + $0x7] sm:$0x1]
        %v718 = vld [vmem:[%s532] sm:$0xf]
        %v719 = vld [vmem:[%s532 + $0x4] sm:$0xf]
        %v720 = vld [vmem:[%s532 + $0x8] sm:$0xf]
        %v721 = vld [vmem:[%s532 + $0xc] sm:$0xf]
        %v722 = vlaneseq
        %v723 = vshrl.u32 %v722, 7
        %v724 = vsub.s32 0, %v723
        %v725 = vrot.slane %v710, %v724
        %v730 = vunpack.c.l.b16 %v718
        %v731 = vunpack.c.l.b16 %v719
        %v732 = vunpack.c.l.b16 %v720
        %v733 = vunpack.c.l.b16 %v721
        %v734 = vpack.c.b16 %v731, %v730
        %v735 = vpack.c.b16 %v733, %v732
        %vm738 = vcmask 261120
        %v740 = vsel %vm738, %v709, 0
        %742 = vmatprep.subr.bf16.mxu0 0
        %743 = vmatpush1.bf16.msra.mxu0 %v734
        %744 = vmatprep.subr.bf16.mxu0 0
        %745 = vmatpush1.bf16.msra.mxu0 %v735
        %746 = vmatprep.subr.bf16.mxu0 0
        %747 = vmatpush1.bf16.msra.mxu0 0
        %748 = vmatprep.subr.bf16.mxu0 0
        %749 = vmatpush1.bf16.msra.mxu0 0
        %750 = vmatprep.subr.bf16.mxu0 0
        %751 = vmatpush1.bf16.msra.mxu0 0
        %752 = vmatprep.subr.bf16.mxu0 0
        %753 = vmatpush1.bf16.msra.mxu0 0
        %754 = vmatprep.subr.bf16.mxu0 0
        %755 = vmatpush1.bf16.msra.mxu0 0
        %756 = vmatprep.subr.bf16.mxu0 0
        %757 = vmatpush1.bf16.msra.mxu0 0
        %758 = vmatprep.subr.bf16.mxu0 0
        %759 = vmatpush1.bf16.msra.mxu0 0
        %760 = vmatprep.subr.bf16.mxu0 0
        %761 = vmatpush1.bf16.msra.mxu0 0
        %762 = vmatprep.subr.bf16.mxu0 0
        %763 = vmatpush1.bf16.msra.mxu0 0
        %764 = vmatprep.subr.bf16.mxu0 0
        %765 = vmatpush1.bf16.msra.mxu0 0
        %766 = vmatprep.subr.bf16.mxu0 0
        %767 = vmatpush1.bf16.msra.mxu0 0
        %768 = vmatprep.subr.bf16.mxu0 0
        %769 = vmatpush1.bf16.msra.mxu0 0
        %770 = vmatprep.subr.bf16.mxu0 0
        %771 = vmatpush1.bf16.msra.mxu0 0
        %772 = vmatprep.subr.bf16.mxu0 0
        %773 = vmatpush1.bf16.msra.mxu0 0
        %774 = vmatprep.mubr.bf16.mxu0 0
        %775 = vmatmul.mubr.bf16.gmra.mrb[0].mxu0 %v740
        %v776 = vpop.f32.mrb[0].mxu0
        %v777 = vadd.f32 %v725, %v776
        %v778 = vpop.f32.mrb[0].mxu0
        %v779 = vpop.f32.mrb[0].mxu0
        %v780 = vadd.f32 %v725, %v779
        %v781 = vpop.f32.mrb[0].mxu0
        %782 = vdwg.mxu0
        %785 = vrot.lane.b32.xlu0 %v777, 120
        %v786 = vpop.permute.xlu0 %785
        %787 = vrot.lane.b32.xlu0 %v780, 120
        %v788 = vpop.permute.xlu0 %787
        %791 = vrot.lane.b32.xlu0 %v777, 112
        %v792 = vpop.permute.xlu0 %791
        %793 = vrot.lane.b32.xlu0 %v780, 112
        %v794 = vpop.permute.xlu0 %793
        %797 = vrot.lane.b32.xlu0 %v777, 104
        %v798 = vpop.permute.xlu0 %797
        %799 = vrot.lane.b32.xlu0 %v780, 104
        %v800 = vpop.permute.xlu0 %799
        %v803 = vpack.c.bf16 %v777, %v777
        %v804 = vpack.c.bf16 %v780, %v780
        %v805 = vpack.c.bf16 %v786, %v786
        %v806 = vpack.c.bf16 %v788, %v788
        %v807 = vpack.c.bf16 %v792, %v792
        %v808 = vpack.c.bf16 %v794, %v794
        %v809 = vpack.c.bf16 %v798, %v798
        %v810 = vpack.c.bf16 %v800, %v800
        %v811 = vld [vmem:[%s1] sm:$0x1]
        %v812 = vld [vmem:[%s1 + $0x1] sm:$0x1]
        %v813 = vsub.f32 1.0, %v811
        %v814 = vsub.f32 1.0, %v812
        %v815 = vmul.f32 %v813, -10000.0
        %v816 = vmul.f32 %v814, -10000.0
        %818 = vrot.lane.b32.xlu0 %v803, 96
        %v819 = vpop.permute.xlu0 %818
        %vm820 = vcmask 64512
        %v822 = vsel %vm820, %v803, 0
        %v825 = vsel %vm820, %v819, 0
        %827 = vmatprep.subr.bf16.mxu0 0
        %828 = vmatpush1.bf16.xpose.msra.mxu0 %v825
        %829 = vmatprep.subr.bf16.mxu0 0
        %830 = vmatpush1.bf16.xpose.msra.mxu0 0
        %831 = vmatprep.subr.bf16.mxu0 0
        %832 = vmatpush1.bf16.xpose.msra.mxu0 0
        %833 = vmatprep.subr.bf16.mxu0 0
        %834 = vmatpush1.bf16.xpose.msra.mxu0 0
        %835 = vmatprep.subr.bf16.mxu0 0
        %836 = vmatpush1.bf16.xpose.msra.mxu0 0
        %837 = vmatprep.subr.bf16.mxu0 0
        %838 = vmatpush1.bf16.xpose.msra.mxu0 0
        %839 = vmatprep.subr.bf16.mxu0 0
        %840 = vmatpush1.bf16.xpose.msra.mxu0 0
        %841 = vmatprep.subr.bf16.mxu0 0
        %842 = vmatpush1.bf16.xpose.msra.mxu0 0
        %843 = vmatprep.subr.bf16.mxu0 0
        %844 = vmatpush1.bf16.xpose.msra.mxu0 0
        %845 = vmatprep.subr.bf16.mxu0 0
        %846 = vmatpush1.bf16.xpose.msra.mxu0 0
        %847 = vmatprep.subr.bf16.mxu0 0
        %848 = vmatpush1.bf16.xpose.msra.mxu0 0
        %849 = vmatprep.subr.bf16.mxu0 0
        %850 = vmatpush1.bf16.xpose.msra.mxu0 0
        %851 = vmatprep.subr.bf16.mxu0 0
        %852 = vmatpush1.bf16.xpose.msra.mxu0 0
        %853 = vmatprep.subr.bf16.mxu0 0
        %854 = vmatpush1.bf16.xpose.msra.mxu0 0
        %855 = vmatprep.subr.bf16.mxu0 0
        %856 = vmatpush1.bf16.xpose.msra.mxu0 0
        %857 = vmatprep.subr.bf16.mxu0 0
        %858 = vmatpush1.bf16.xpose.msra.mxu0 0
        %859 = vmatprep.mubr.bf16.mxu0 0
        %860 = vmatmul.mubr.bf16.gmra.mrb[0].mxu0 %v822
        %v861 = vpop.f32.mrb[0].mxu0
        %v862 = vadd.f32 0.0, %v861
        %v863 = vpop.f32.mrb[0].mxu0
        %v864 = vpop.f32.mrb[0].mxu0
        %v865 = vpop.f32.mrb[0].mxu0
        %866 = vdwg.mxu0
        %868 = vrot.lane.b32.xlu0 %v804, 96
        %v869 = vpop.permute.xlu0 %868
        %v871 = vsel %vm820, %v804, 0
        %v874 = vsel %vm820, %v869, 0
        %876 = vmatprep.subr.bf16.mxu0 0
        %877 = vmatpush1.bf16.xpose.msra.mxu0 %v874
        %878 = vmatprep.subr.bf16.mxu0 0
        %879 = vmatpush1.bf16.xpose.msra.mxu0 0
        %880 = vmatprep.subr.bf16.mxu0 0
        %881 = vmatpush1.bf16.xpose.msra.mxu0 0
        %882 = vmatprep.subr.bf16.mxu0 0
        %883 = vmatpush1.bf16.xpose.msra.mxu0 0
        %884 = vmatprep.subr.bf16.mxu0 0
        %885 = vmatpush1.bf16.xpose.msra.mxu0 0
        %886 = vmatprep.subr.bf16.mxu0 0
        %887 = vmatpush1.bf16.xpose.msra.mxu0 0
        %888 = vmatprep.subr.bf16.mxu0 0
        %889 = vmatpush1.bf16.xpose.msra.mxu0 0
        %890 = vmatprep.subr.bf16.mxu0 0
        %891 = vmatpush1.bf16.xpose.msra.mxu0 0
        %892 = vmatprep.subr.bf16.mxu0 0
        %893 = vmatpush1.bf16.xpose.msra.mxu0 0
        %894 = vmatprep.subr.bf16.mxu0 0
        %895 = vmatpush1.bf16.xpose.msra.mxu0 0
        %896 = vmatprep.subr.bf16.mxu0 0
        %897 = vmatpush1.bf16.xpose.msra.mxu0 0
        %898 = vmatprep.subr.bf16.mxu0 0
        %899 = vmatpush1.bf16.xpose.msra.mxu0 0
        %900 = vmatprep.subr.bf16.mxu0 0
        %901 = vmatpush1.bf16.xpose.msra.mxu0 0
        %902 = vmatprep.subr.bf16.mxu0 0
        %903 = vmatpush1.bf16.xpose.msra.mxu0 0
        %904 = vmatprep.subr.bf16.mxu0 0
        %905 = vmatpush1.bf16.xpose.msra.mxu0 0
        %906 = vmatprep.subr.bf16.mxu0 0
        %907 = vmatpush1.bf16.xpose.msra.mxu0 0
        %908 = vmatprep.mubr.bf16.mxu0 0
        %909 = vmatmul.mubr.bf16.gmra.mrb[0].mxu0 %v871
        %v910 = vpop.f32.mrb[0].mxu0
        %v911 = vadd.f32 0.0, %v910
        %v912 = vpop.f32.mrb[0].mxu0
        %v913 = vpop.f32.mrb[0].mxu0
        %v914 = vpop.f32.mrb[0].mxu0
        %915 = vdwg.mxu0
        %917 = vrot.lane.b32.xlu0 %v805, 96
        %v918 = vpop.permute.xlu0 %917
        %v920 = vsel %vm820, %v805, 0
        %v923 = vsel %vm820, %v918, 0
        %925 = vmatprep.subr.bf16.mxu0 0
        %926 = vmatpush1.bf16.xpose.msra.mxu0 %v923
        %927 = vmatprep.subr.bf16.mxu0 0
        %928 = vmatpush1.bf16.xpose.msra.mxu0 0
        %929 = vmatprep.subr.bf16.mxu0 0
        %930 = vmatpush1.bf16.xpose.msra.mxu0 0
        %931 = vmatprep.subr.bf16.mxu0 0
        %932 = vmatpush1.bf16.xpose.msra.mxu0 0
        %933 = vmatprep.subr.bf16.mxu0 0
        %934 = vmatpush1.bf16.xpose.msra.mxu0 0
        %935 = vmatprep.subr.bf16.mxu0 0
        %936 = vmatpush1.bf16.xpose.msra.mxu0 0
        %937 = vmatprep.subr.bf16.mxu0 0
        %938 = vmatpush1.bf16.xpose.msra.mxu0 0
        %939 = vmatprep.subr.bf16.mxu0 0
        %940 = vmatpush1.bf16.xpose.msra.mxu0 0
        %941 = vmatprep.subr.bf16.mxu0 0
        %942 = vmatpush1.bf16.xpose.msra.mxu0 0
        %943 = vmatprep.subr.bf16.mxu0 0
        %944 = vmatpush1.bf16.xpose.msra.mxu0 0
        %945 = vmatprep.subr.bf16.mxu0 0
        %946 = vmatpush1.bf16.xpose.msra.mxu0 0
        %947 = vmatprep.subr.bf16.mxu0 0
        %948 = vmatpush1.bf16.xpose.msra.mxu0 0
        %949 = vmatprep.subr.bf16.mxu0 0
        %950 = vmatpush1.bf16.xpose.msra.mxu0 0
        %951 = vmatprep.subr.bf16.mxu0 0
        %952 = vmatpush1.bf16.xpose.msra.mxu0 0
        %953 = vmatprep.subr.bf16.mxu0 0
        %954 = vmatpush1.bf16.xpose.msra.mxu0 0
        %955 = vmatprep.subr.bf16.mxu0 0
        %956 = vmatpush1.bf16.xpose.msra.mxu0 0
        %957 = vmatprep.mubr.bf16.mxu0 0
        %958 = vmatmul.mubr.bf16.gmra.mrb[0].mxu0 %v920
        %v959 = vpop.f32.mrb[0].mxu0
        %v960 = vadd.f32 0.0, %v959
        %v961 = vpop.f32.mrb[0].mxu0
        %v962 = vpop.f32.mrb[0].mxu0
        %v963 = vpop.f32.mrb[0].mxu0
        %964 = vdwg.mxu0
        %966 = vrot.lane.b32.xlu0 %v806, 96
        %v967 = vpop.permute.xlu0 %966
        %v969 = vsel %vm820, %v806, 0
        %v972 = vsel %vm820, %v967, 0
        %974 = vmatprep.subr.bf16.mxu0 0
        %975 = vmatpush1.bf16.xpose.msra.mxu0 %v972
        %976 = vmatprep.subr.bf16.mxu0 0
        %977 = vmatpush1.bf16.xpose.msra.mxu0 0
        %978 = vmatprep.subr.bf16.mxu0 0
        %979 = vmatpush1.bf16.xpose.msra.mxu0 0
        %980 = vmatprep.subr.bf16.mxu0 0
        %981 = vmatpush1.bf16.xpose.msra.mxu0 0
        %982 = vmatprep.subr.bf16.mxu0 0
        %983 = vmatpush1.bf16.xpose.msra.mxu0 0
        %984 = vmatprep.subr.bf16.mxu0 0
        %985 = vmatpush1.bf16.xpose.msra.mxu0 0
        %986 = vmatprep.subr.bf16.mxu0 0
        %987 = vmatpush1.bf16.xpose.msra.mxu0 0
        %988 = vmatprep.subr.bf16.mxu0 0
        %989 = vmatpush1.bf16.xpose.msra.mxu0 0
        %990 = vmatprep.subr.bf16.mxu0 0
        %991 = vmatpush1.bf16.xpose.msra.mxu0 0
        %992 = vmatprep.subr.bf16.mxu0 0
        %993 = vmatpush1.bf16.xpose.msra.mxu0 0
        %994 = vmatprep.subr.bf16.mxu0 0
        %995 = vmatpush1.bf16.xpose.msra.mxu0 0
        %996 = vmatprep.subr.bf16.mxu0 0
        %997 = vmatpush1.bf16.xpose.msra.mxu0 0
        %998 = vmatprep.subr.bf16.mxu0 0
        %999 = vmatpush1.bf16.xpose.msra.mxu0 0
        %1000 = vmatprep.subr.bf16.mxu0 0
        %1001 = vmatpush1.bf16.xpose.msra.mxu0 0
        %1002 = vmatprep.subr.bf16.mxu0 0
        %1003 = vmatpush1.bf16.xpose.msra.mxu0 0
        %1004 = vmatprep.subr.bf16.mxu0 0
        %1005 = vmatpush1.bf16.xpose.msra.mxu0 0
        %1006 = vmatprep.mubr.bf16.mxu0 0
        %1007 = vmatmul.mubr.bf16.gmra.mrb[0].mxu0 %v969
        %v1008 = vpop.f32.mrb[0].mxu0
        %v1009 = vadd.f32 0.0, %v1008
        %v1010 = vpop.f32.mrb[0].mxu0
        %v1011 = vpop.f32.mrb[0].mxu0
        %v1012 = vpop.f32.mrb[0].mxu0
        %1013 = vdwg.mxu0
        %1015 = vrot.lane.b32.xlu0 %v807, 96
        %v1016 = vpop.permute.xlu0 %1015
        %v1018 = vsel %vm820, %v807, 0
        %v1021 = vsel %vm820, %v1016, 0
        %1023 = vmatprep.subr.bf16.mxu0 0
        %1024 = vmatpush1.bf16.xpose.msra.mxu0 %v1021
        %1025 = vmatprep.subr.bf16.mxu0 0
        %1026 = vmatpush1.bf16.xpose.msra.mxu0 0
        %1027 = vmatprep.subr.bf16.mxu0 0
        %1028 = vmatpush1.bf16.xpose.msra.mxu0 0
        %1029 = vmatprep.subr.bf16.mxu0 0
        %1030 = vmatpush1.bf16.xpose.msra.mxu0 0
        %1031 = vmatprep.subr.bf16.mxu0 0
        %1032 = vmatpush1.bf16.xpose.msra.mxu0 0
        %1033 = vmatprep.subr.bf16.mxu0 0
        %1034 = vmatpush1.bf16.xpose.msra.mxu0 0
        %1035 = vmatprep.subr.bf16.mxu0 0
        %1036 = vmatpush1.bf16.xpose.msra.mxu0 0
        %1037 = vmatprep.subr.bf16.mxu0 0
        %1038 = vmatpush1.bf16.xpose.msra.mxu0 0
        %1039 = vmatprep.subr.bf16.mxu0 0
        %1040 = vmatpush1.bf16.xpose.msra.mxu0 0
        %1041 = vmatprep.subr.bf16.mxu0 0
        %1042 = vmatpush1.bf16.xpose.msra.mxu0 0
        %1043 = vmatprep.subr.bf16.mxu0 0
        %1044 = vmatpush1.bf16.xpose.msra.mxu0 0
        %1045 = vmatprep.subr.bf16.mxu0 0
        %1046 = vmatpush1.bf16.xpose.msra.mxu0 0
        %1047 = vmatprep.subr.bf16.mxu0 0
        %1048 = vmatpush1.bf16.xpose.msra.mxu0 0
        %1049 = vmatprep.subr.bf16.mxu0 0
        %1050 = vmatpush1.bf16.xpose.msra.mxu0 0
        %1051 = vmatprep.subr.bf16.mxu0 0
        %1052 = vmatpush1.bf16.xpose.msra.mxu0 0
        %1053 = vmatprep.subr.bf16.mxu0 0
        %1054 = vmatpush1.bf16.xpose.msra.mxu0 0
        %1055 = vmatprep.mubr.bf16.mxu0 0
        %1056 = vmatmul.mubr.bf16.gmra.mrb[0].mxu0 %v1018
        %v1057 = vpop.f32.mrb[0].mxu0
        %v1058 = vadd.f32 0.0, %v1057
        %v1059 = vpop.f32.mrb[0].mxu0
        %v1060 = vpop.f32.mrb[0].mxu0
        %v1061 = vpop.f32.mrb[0].mxu0
        %1062 = vdwg.mxu0
        %1064 = vrot.lane.b32.xlu0 %v808, 96
        %v1065 = vpop.permute.xlu0 %1064
        %v1067 = vsel %vm820, %v808, 0
        %v1070 = vsel %vm820, %v1065, 0
        %1072 = vmatprep.subr.bf16.mxu0 0
        %1073 = vmatpush1.bf16.xpose.msra.mxu0 %v1070
        %1074 = vmatprep.subr.bf16.mxu0 0
        %1075 = vmatpush1.bf16.xpose.msra.mxu0 0
        %1076 = vmatprep.subr.bf16.mxu0 0
        %1077 = vmatpush1.bf16.xpose.msra.mxu0 0
        %1078 = vmatprep.subr.bf16.mxu0 0
        %1079 = vmatpush1.bf16.xpose.msra.mxu0 0
        %1080 = vmatprep.subr.bf16.mxu0 0
        %1081 = vmatpush1.bf16.xpose.msra.mxu0 0
        %1082 = vmatprep.subr.bf16.mxu0 0
        %1083 = vmatpush1.bf16.xpose.msra.mxu0 0
        %1084 = vmatprep.subr.bf16.mxu0 0
        %1085 = vmatpush1.bf16.xpose.msra.mxu0 0
        %1086 = vmatprep.subr.bf16.mxu0 0
        %1087 = vmatpush1.bf16.xpose.msra.mxu0 0
        %1088 = vmatprep.subr.bf16.mxu0 0
        %1089 = vmatpush1.bf16.xpose.msra.mxu0 0
        %1090 = vmatprep.subr.bf16.mxu0 0
        %1091 = vmatpush1.bf16.xpose.msra.mxu0 0
        %1092 = vmatprep.subr.bf16.mxu0 0
        %1093 = vmatpush1.bf16.xpose.msra.mxu0 0
        %1094 = vmatprep.subr.bf16.mxu0 0
        %1095 = vmatpush1.bf16.xpose.msra.mxu0 0
        %1096 = vmatprep.subr.bf16.mxu0 0
        %1097 = vmatpush1.bf16.xpose.msra.mxu0 0
        %1098 = vmatprep.subr.bf16.mxu0 0
        %1099 = vmatpush1.bf16.xpose.msra.mxu0 0
        %1100 = vmatprep.subr.bf16.mxu0 0
        %1101 = vmatpush1.bf16.xpose.msra.mxu0 0
        %1102 = vmatprep.subr.bf16.mxu0 0
        %1103 = vmatpush1.bf16.xpose.msra.mxu0 0
        %1104 = vmatprep.mubr.bf16.mxu0 0
        %1105 = vmatmul.mubr.bf16.gmra.mrb[0].mxu0 %v1067
        %v1106 = vpop.f32.mrb[0].mxu0
        %v1107 = vadd.f32 0.0, %v1106
        %v1108 = vpop.f32.mrb[0].mxu0
        %v1109 = vpop.f32.mrb[0].mxu0
        %v1110 = vpop.f32.mrb[0].mxu0
        %1111 = vdwg.mxu0
        %1113 = vrot.lane.b32.xlu0 %v809, 96
        %v1114 = vpop.permute.xlu0 %1113
        %v1116 = vsel %vm820, %v809, 0
        %v1119 = vsel %vm820, %v1114, 0
        %1121 = vmatprep.subr.bf16.mxu0 0
        %1122 = vmatpush1.bf16.xpose.msra.mxu0 %v1119
        %1123 = vmatprep.subr.bf16.mxu0 0
        %1124 = vmatpush1.bf16.xpose.msra.mxu0 0
        %1125 = vmatprep.subr.bf16.mxu0 0
        %1126 = vmatpush1.bf16.xpose.msra.mxu0 0
        %1127 = vmatprep.subr.bf16.mxu0 0
        %1128 = vmatpush1.bf16.xpose.msra.mxu0 0
        %1129 = vmatprep.subr.bf16.mxu0 0
        %1130 = vmatpush1.bf16.xpose.msra.mxu0 0
        %1131 = vmatprep.subr.bf16.mxu0 0
        %1132 = vmatpush1.bf16.xpose.msra.mxu0 0
        %1133 = vmatprep.subr.bf16.mxu0 0
        %1134 = vmatpush1.bf16.xpose.msra.mxu0 0
        %1135 = vmatprep.subr.bf16.mxu0 0
        %1136 = vmatpush1.bf16.xpose.msra.mxu0 0
        %1137 = vmatprep.subr.bf16.mxu0 0
        %1138 = vmatpush1.bf16.xpose.msra.mxu0 0
        %1139 = vmatprep.subr.bf16.mxu0 0
        %1140 = vmatpush1.bf16.xpose.msra.mxu0 0
        %1141 = vmatprep.subr.bf16.mxu0 0
        %1142 = vmatpush1.bf16.xpose.msra.mxu0 0
        %1143 = vmatprep.subr.bf16.mxu0 0
        %1144 = vmatpush1.bf16.xpose.msra.mxu0 0
        %1145 = vmatprep.subr.bf16.mxu0 0
        %1146 = vmatpush1.bf16.xpose.msra.mxu0 0
        %1147 = vmatprep.subr.bf16.mxu0 0
        %1148 = vmatpush1.bf16.xpose.msra.mxu0 0
        %1149 = vmatprep.subr.bf16.mxu0 0
        %1150 = vmatpush1.bf16.xpose.msra.mxu0 0
        %1151 = vmatprep.subr.bf16.mxu0 0
        %1152 = vmatpush1.bf16.xpose.msra.mxu0 0
        %1153 = vmatprep.mubr.bf16.mxu0 0
        %1154 = vmatmul.mubr.bf16.gmra.mrb[0].mxu0 %v1116
        %v1155 = vpop.f32.mrb[0].mxu0
        %v1156 = vadd.f32 0.0, %v1155
        %v1157 = vpop.f32.mrb[0].mxu0
        %v1158 = vpop.f32.mrb[0].mxu0
        %v1159 = vpop.f32.mrb[0].mxu0
        %1160 = vdwg.mxu0
        %1162 = vrot.lane.b32.xlu0 %v810, 96
        %v1163 = vpop.permute.xlu0 %1162
        %v1165 = vsel %vm820, %v810, 0
        %v1168 = vsel %vm820, %v1163, 0
        %1170 = vmatprep.subr.bf16.mxu0 0
        %1171 = vmatpush1.bf16.xpose.msra.mxu0 %v1168
        %1172 = vmatprep.subr.bf16.mxu0 0
        %1173 = vmatpush1.bf16.xpose.msra.mxu0 0
        %1174 = vmatprep.subr.bf16.mxu0 0
        %1175 = vmatpush1.bf16.xpose.msra.mxu0 0
        %1176 = vmatprep.subr.bf16.mxu0 0
        %1177 = vmatpush1.bf16.xpose.msra.mxu0 0
        %1178 = vmatprep.subr.bf16.mxu0 0
        %1179 = vmatpush1.bf16.xpose.msra.mxu0 0
        %1180 = vmatprep.subr.bf16.mxu0 0
        %1181 = vmatpush1.bf16.xpose.msra.mxu0 0
        %1182 = vmatprep.subr.bf16.mxu0 0
        %1183 = vmatpush1.bf16.xpose.msra.mxu0 0
        %1184 = vmatprep.subr.bf16.mxu0 0
        %1185 = vmatpush1.bf16.xpose.msra.mxu0 0
        %1186 = vmatprep.subr.bf16.mxu0 0
        %1187 = vmatpush1.bf16.xpose.msra.mxu0 0
        %1188 = vmatprep.subr.bf16.mxu0 0
        %1189 = vmatpush1.bf16.xpose.msra.mxu0 0
        %1190 = vmatprep.subr.bf16.mxu0 0
        %1191 = vmatpush1.bf16.xpose.msra.mxu0 0
        %1192 = vmatprep.subr.bf16.mxu0 0
        %1193 = vmatpush1.bf16.xpose.msra.mxu0 0
        %1194 = vmatprep.subr.bf16.mxu0 0
        %1195 = vmatpush1.bf16.xpose.msra.mxu0 0
        %1196 = vmatprep.subr.bf16.mxu0 0
        %1197 = vmatpush1.bf16.xpose.msra.mxu0 0
        %1198 = vmatprep.subr.bf16.mxu0 0
        %1199 = vmatpush1.bf16.xpose.msra.mxu0 0
        %1200 = vmatprep.subr.bf16.mxu0 0
        %1201 = vmatpush1.bf16.xpose.msra.mxu0 0
        %1202 = vmatprep.mubr.bf16.mxu0 0
        %1203 = vmatmul.mubr.bf16.gmra.mrb[0].mxu0 %v1165
        %v1204 = vpop.f32.mrb[0].mxu0
        %v1205 = vadd.f32 0.0, %v1204
        %v1206 = vpop.f32.mrb[0].mxu0
        %v1207 = vpop.f32.mrb[0].mxu0
        %v1208 = vpop.f32.mrb[0].mxu0
        %1209 = vdwg.mxu0
        %v1210 = vmul.f32 %v862, 0.35355338
        %v1211 = vmul.f32 %v911, 0.35355338
        %v1212 = vmul.f32 %v960, 0.35355338
        %v1213 = vmul.f32 %v1009, 0.35355338
        %v1214 = vmul.f32 %v1058, 0.35355338
        %v1215 = vmul.f32 %v1107, 0.35355338
        %v1216 = vmul.f32 %v1156, 0.35355338
        %v1217 = vmul.f32 %v1205, 0.35355338
        %v1220 = vlaneseq
        %v1221 = vshrl.u32 %v1220, 7
        %v1222 = vsub.s32 0, %v1221
        %v1223 = vrot.slane %v815, %v1222
        %v1224 = vlaneseq
        %v1225 = vshrl.u32 %v1224, 7
        %v1226 = vsub.s32 0, %v1225
        %v1227 = vrot.slane %v816, %v1226
        %v1230 = vadd.f32 %v1210, %v1223
        %v1231 = vadd.f32 %v1211, %v1227
        %v1232 = vadd.f32 %v1212, %v1223
        %v1233 = vadd.f32 %v1213, %v1227
        %v1234 = vadd.f32 %v1214, %v1223
        %v1235 = vadd.f32 %v1215, %v1227
        %v1236 = vadd.f32 %v1216, %v1223
        %v1237 = vadd.f32 %v1217, %v1227
        %v1238 = vsel %vm820, %v1230, -inf
        %1239 = vmax.xlane.f32.xlu0 %v1238
        %v1240 = vpop.xlane.xlu0 %1239
        %v1241 = vsel %vm820, %v1231, -inf
        %1242 = vmax.xlane.f32.xlu0 %v1241
        %v1243 = vpop.xlane.xlu0 %1242
        %v1244 = vsel %vm820, %v1232, -inf
        %1245 = vmax.xlane.f32.xlu0 %v1244
        %v1246 = vpop.xlane.xlu0 %1245
        %v1247 = vsel %vm820, %v1233, -inf
        %1248 = vmax.xlane.f32.xlu0 %v1247
        %v1249 = vpop.xlane.xlu0 %1248
        %v1250 = vsel %vm820, %v1234, -inf
        %1251 = vmax.xlane.f32.xlu0 %v1250
        %v1252 = vpop.xlane.xlu0 %1251
        %v1253 = vsel %vm820, %v1235, -inf
        %1254 = vmax.xlane.f32.xlu0 %v1253
        %v1255 = vpop.xlane.xlu0 %1254
        %v1256 = vsel %vm820, %v1236, -inf
        %1257 = vmax.xlane.f32.xlu0 %v1256
        %v1258 = vpop.xlane.xlu0 %1257
        %v1259 = vsel %vm820, %v1237, -inf
        %1260 = vmax.xlane.f32.xlu0 %v1259
        %v1261 = vpop.xlane.xlu0 %1260
        %v1262 = vsub.f32 %v1230, %v1240
        %v1263 = vsub.f32 %v1231, %v1243
        %v1264 = vsub.f32 %v1232, %v1246
        %v1265 = vsub.f32 %v1233, %v1249
        %v1266 = vsub.f32 %v1234, %v1252
        %v1267 = vsub.f32 %v1235, %v1255
        %v1268 = vsub.f32 %v1236, %v1258
        %v1269 = vsub.f32 %v1237, %v1261
        %v1270 = vmul.f32 %v1262, 1.442695
        %v1271 = vpow.pop %v1270
        %v1272 = vmul.f32 %v1263, 1.442695
        %v1273 = vpow.pop %v1272
        %v1274 = vmul.f32 %v1264, 1.442695
        %v1275 = vpow.pop %v1274
        %v1276 = vmul.f32 %v1265, 1.442695
        %v1277 = vpow.pop %v1276
        %v1278 = vmul.f32 %v1266, 1.442695
        %v1279 = vpow.pop %v1278
        %v1280 = vmul.f32 %v1267, 1.442695
        %v1281 = vpow.pop %v1280
        %v1282 = vmul.f32 %v1268, 1.442695
        %v1283 = vpow.pop %v1282
        %v1284 = vmul.f32 %v1269, 1.442695
        %v1285 = vpow.pop %v1284
        %v1286 = vsel %vm820, %v1271, 0.0
        %1287 = vadd.xlane.f32.xlu0 %v1286
        %v1288 = vpop.xlane.xlu0 %1287
        %v1289 = vsel %vm820, %v1273, 0.0
        %1290 = vadd.xlane.f32.xlu0 %v1289
        %v1291 = vpop.xlane.xlu0 %1290
        %v1292 = vsel %vm820, %v1275, 0.0
        %1293 = vadd.xlane.f32.xlu0 %v1292
        %v1294 = vpop.xlane.xlu0 %1293
        %v1295 = vsel %vm820, %v1277, 0.0
        %1296 = vadd.xlane.f32.xlu0 %v1295
        %v1297 = vpop.xlane.xlu0 %1296
        %v1298 = vsel %vm820, %v1279, 0.0
        %1299 = vadd.xlane.f32.xlu0 %v1298
        %v1300 = vpop.xlane.xlu0 %1299
        %v1301 = vsel %vm820, %v1281, 0.0
        %1302 = vadd.xlane.f32.xlu0 %v1301
        %v1303 = vpop.xlane.xlu0 %1302
        %v1304 = vsel %vm820, %v1283, 0.0
        %1305 = vadd.xlane.f32.xlu0 %v1304
        %v1306 = vpop.xlane.xlu0 %1305
        %v1307 = vsel %vm820, %v1285, 0.0
        %1308 = vadd.xlane.f32.xlu0 %v1307
        %v1309 = vpop.xlane.xlu0 %1308
        %v1310 = vrcp.pop %v1288
        %v1311 = vrcp.pop %v1291
        %v1312 = vrcp.pop %v1294
        %v1313 = vrcp.pop %v1297
        %v1314 = vrcp.pop %v1300
        %v1315 = vrcp.pop %v1303
        %v1316 = vrcp.pop %v1306
        %v1317 = vrcp.pop %v1309
        %v1318 = vmul.f32 %v1271, %v1310
        %v1319 = vmul.f32 %v1273, %v1311
        %v1320 = vmul.f32 %v1275, %v1312
        %v1321 = vmul.f32 %v1277, %v1313
        %v1322 = vmul.f32 %v1279, %v1314
        %v1323 = vmul.f32 %v1281, %v1315
        %v1324 = vmul.f32 %v1283, %v1316
        %v1325 = vmul.f32 %v1285, %v1317
        %v1326 = vpack.c.bf16 %v1318, %v1318
        %v1327 = vpack.c.bf16 %v1319, %v1319
        %v1328 = vpack.c.bf16 %v1320, %v1320
        %v1329 = vpack.c.bf16 %v1321, %v1321
        %v1330 = vpack.c.bf16 %v1322, %v1322
        %v1331 = vpack.c.bf16 %v1323, %v1323
        %v1332 = vpack.c.bf16 %v1324, %v1324
        %v1333 = vpack.c.bf16 %v1325, %v1325
        %1334 = vrot.lane.b32.xlu0 %v803, 64
        %v1335 = vpop.permute.xlu0 %1334
        %v1337 = vsel %vm820, %v1326, 0
        %vm1339 = vcmask 1043456
        %v1341 = vsel %vm1339, %v1335, 0
        %1343 = vmatprep.subr.bf16.mxu0 0
        %1344 = vmatpush1.bf16.msra.mxu0 %v1341
        %1345 = vmatprep.subr.bf16.mxu0 0
        %1346 = vmatpush1.bf16.msra.mxu0 0
        %1347 = vmatprep.subr.bf16.mxu0 0
        %1348 = vmatpush1.bf16.msra.mxu0 0
        %1349 = vmatprep.subr.bf16.mxu0 0
        %1350 = vmatpush1.bf16.msra.mxu0 0
        %1351 = vmatprep.subr.bf16.mxu0 0
        %1352 = vmatpush1.bf16.msra.mxu0 0
        %1353 = vmatprep.subr.bf16.mxu0 0
        %1354 = vmatpush1.bf16.msra.mxu0 0
        %1355 = vmatprep.subr.bf16.mxu0 0
        %1356 = vmatpush1.bf16.msra.mxu0 0
        %1357 = vmatprep.subr.bf16.mxu0 0
        %1358 = vmatpush1.bf16.msra.mxu0 0
        %1359 = vmatprep.subr.bf16.mxu0 0
        %1360 = vmatpush1.bf16.msra.mxu0 0
        %1361 = vmatprep.subr.bf16.mxu0 0
        %1362 = vmatpush1.bf16.msra.mxu0 0
        %1363 = vmatprep.subr.bf16.mxu0 0
        %1364 = vmatpush1.bf16.msra.mxu0 0
        %1365 = vmatprep.subr.bf16.mxu0 0
        %1366 = vmatpush1.bf16.msra.mxu0 0
        %1367 = vmatprep.subr.bf16.mxu0 0
        %1368 = vmatpush1.bf16.msra.mxu0 0
        %1369 = vmatprep.subr.bf16.mxu0 0
        %1370 = vmatpush1.bf16.msra.mxu0 0
        %1371 = vmatprep.subr.bf16.mxu0 0
        %1372 = vmatpush1.bf16.msra.mxu0 0
        %1373 = vmatprep.subr.bf16.mxu0 0
        %1374 = vmatpush1.bf16.msra.mxu0 0
        %1375 = vmatprep.mubr.bf16.mxu0 0
        %1376 = vmatmul.mubr.bf16.gmra.mrb[0].mxu0 %v1337
        %v1377 = vpop.f32.mrb[0].mxu0
        %v1378 = vadd.f32 0.0, %v1377
        %v1379 = vpop.f32.mrb[0].mxu0
        %v1380 = vpop.f32.mrb[0].mxu0
        %v1381 = vpop.f32.mrb[0].mxu0
        %1382 = vdwg.mxu0
        %1383 = vrot.lane.b32.xlu0 %v804, 64
        %v1384 = vpop.permute.xlu0 %1383
        %v1386 = vsel %vm820, %v1327, 0
        %v1389 = vsel %vm1339, %v1384, 0
        %1391 = vmatprep.subr.bf16.mxu0 0
        %1392 = vmatpush1.bf16.msra.mxu0 %v1389
        %1393 = vmatprep.subr.bf16.mxu0 0
        %1394 = vmatpush1.bf16.msra.mxu0 0
        %1395 = vmatprep.subr.bf16.mxu0 0
        %1396 = vmatpush1.bf16.msra.mxu0 0
        %1397 = vmatprep.subr.bf16.mxu0 0
        %1398 = vmatpush1.bf16.msra.mxu0 0
        %1399 = vmatprep.subr.bf16.mxu0 0
        %1400 = vmatpush1.bf16.msra.mxu0 0
        %1401 = vmatprep.subr.bf16.mxu0 0
        %1402 = vmatpush1.bf16.msra.mxu0 0
        %1403 = vmatprep.subr.bf16.mxu0 0
        %1404 = vmatpush1.bf16.msra.mxu0 0
        %1405 = vmatprep.subr.bf16.mxu0 0
        %1406 = vmatpush1.bf16.msra.mxu0 0
        %1407 = vmatprep.subr.bf16.mxu0 0
        %1408 = vmatpush1.bf16.msra.mxu0 0
        %1409 = vmatprep.subr.bf16.mxu0 0
        %1410 = vmatpush1.bf16.msra.mxu0 0
        %1411 = vmatprep.subr.bf16.mxu0 0
        %1412 = vmatpush1.bf16.msra.mxu0 0
        %1413 = vmatprep.subr.bf16.mxu0 0
        %1414 = vmatpush1.bf16.msra.mxu0 0
        %1415 = vmatprep.subr.bf16.mxu0 0
        %1416 = vmatpush1.bf16.msra.mxu0 0
        %1417 = vmatprep.subr.bf16.mxu0 0
        %1418 = vmatpush1.bf16.msra.mxu0 0
        %1419 = vmatprep.subr.bf16.mxu0 0
        %1420 = vmatpush1.bf16.msra.mxu0 0
        %1421 = vmatprep.subr.bf16.mxu0 0
        %1422 = vmatpush1.bf16.msra.mxu0 0
        %1423 = vmatprep.mubr.bf16.mxu0 0
        %1424 = vmatmul.mubr.bf16.gmra.mrb[0].mxu0 %v1386
        %v1425 = vpop.f32.mrb[0].mxu0
        %v1426 = vadd.f32 0.0, %v1425
        %v1427 = vpop.f32.mrb[0].mxu0
        %v1428 = vpop.f32.mrb[0].mxu0
        %v1429 = vpop.f32.mrb[0].mxu0
        %1430 = vdwg.mxu0
        %1431 = vrot.lane.b32.xlu0 %v805, 64
        %v1432 = vpop.permute.xlu0 %1431
        %v1434 = vsel %vm820, %v1328, 0
        %v1437 = vsel %vm1339, %v1432, 0
        %1439 = vmatprep.subr.bf16.mxu0 0
        %1440 = vmatpush1.bf16.msra.mxu0 %v1437
        %1441 = vmatprep.subr.bf16.mxu0 0
        %1442 = vmatpush1.bf16.msra.mxu0 0
        %1443 = vmatprep.subr.bf16.mxu0 0
        %1444 = vmatpush1.bf16.msra.mxu0 0
        %1445 = vmatprep.subr.bf16.mxu0 0
        %1446 = vmatpush1.bf16.msra.mxu0 0
        %1447 = vmatprep.subr.bf16.mxu0 0
        %1448 = vmatpush1.bf16.msra.mxu0 0
        %1449 = vmatprep.subr.bf16.mxu0 0
        %1450 = vmatpush1.bf16.msra.mxu0 0
        %1451 = vmatprep.subr.bf16.mxu0 0
        %1452 = vmatpush1.bf16.msra.mxu0 0
        %1453 = vmatprep.subr.bf16.mxu0 0
        %1454 = vmatpush1.bf16.msra.mxu0 0
        %1455 = vmatprep.subr.bf16.mxu0 0
        %1456 = vmatpush1.bf16.msra.mxu0 0
        %1457 = vmatprep.subr.bf16.mxu0 0
        %1458 = vmatpush1.bf16.msra.mxu0 0
        %1459 = vmatprep.subr.bf16.mxu0 0
        %1460 = vmatpush1.bf16.msra.mxu0 0
        %1461 = vmatprep.subr.bf16.mxu0 0
        %1462 = vmatpush1.bf16.msra.mxu0 0
        %1463 = vmatprep.subr.bf16.mxu0 0
        %1464 = vmatpush1.bf16.msra.mxu0 0
        %1465 = vmatprep.subr.bf16.mxu0 0
        %1466 = vmatpush1.bf16.msra.mxu0 0
        %1467 = vmatprep.subr.bf16.mxu0 0
        %1468 = vmatpush1.bf16.msra.mxu0 0
        %1469 = vmatprep.subr.bf16.mxu0 0
        %1470 = vmatpush1.bf16.msra.mxu0 0
        %1471 = vmatprep.mubr.bf16.mxu0 0
        %1472 = vmatmul.mubr.bf16.gmra.mrb[0].mxu0 %v1434
        %v1473 = vpop.f32.mrb[0].mxu0
        %v1474 = vadd.f32 0.0, %v1473
        %v1475 = vpop.f32.mrb[0].mxu0
        %v1476 = vpop.f32.mrb[0].mxu0
        %v1477 = vpop.f32.mrb[0].mxu0
        %1478 = vdwg.mxu0
        %1479 = vrot.lane.b32.xlu0 %v806, 64
        %v1480 = vpop.permute.xlu0 %1479
        %v1482 = vsel %vm820, %v1329, 0
        %v1485 = vsel %vm1339, %v1480, 0
        %1487 = vmatprep.subr.bf16.mxu0 0
        %1488 = vmatpush1.bf16.msra.mxu0 %v1485
        %1489 = vmatprep.subr.bf16.mxu0 0
        %1490 = vmatpush1.bf16.msra.mxu0 0
        %1491 = vmatprep.subr.bf16.mxu0 0
        %1492 = vmatpush1.bf16.msra.mxu0 0
        %1493 = vmatprep.subr.bf16.mxu0 0
        %1494 = vmatpush1.bf16.msra.mxu0 0
        %1495 = vmatprep.subr.bf16.mxu0 0
        %1496 = vmatpush1.bf16.msra.mxu0 0
        %1497 = vmatprep.subr.bf16.mxu0 0
        %1498 = vmatpush1.bf16.msra.mxu0 0
        %1499 = vmatprep.subr.bf16.mxu0 0
        %1500 = vmatpush1.bf16.msra.mxu0 0
        %1501 = vmatprep.subr.bf16.mxu0 0
        %1502 = vmatpush1.bf16.msra.mxu0 0
        %1503 = vmatprep.subr.bf16.mxu0 0
        %1504 = vmatpush1.bf16.msra.mxu0 0
        %1505 = vmatprep.subr.bf16.mxu0 0
        %1506 = vmatpush1.bf16.msra.mxu0 0
        %1507 = vmatprep.subr.bf16.mxu0 0
        %1508 = vmatpush1.bf16.msra.mxu0 0
        %1509 = vmatprep.subr.bf16.mxu0 0
        %1510 = vmatpush1.bf16.msra.mxu0 0
        %1511 = vmatprep.subr.bf16.mxu0 0
        %1512 = vmatpush1.bf16.msra.mxu0 0
        %1513 = vmatprep.subr.bf16.mxu0 0
        %1514 = vmatpush1.bf16.msra.mxu0 0
        %1515 = vmatprep.subr.bf16.mxu0 0
        %1516 = vmatpush1.bf16.msra.mxu0 0
        %1517 = vmatprep.subr.bf16.mxu0 0
        %1518 = vmatpush1.bf16.msra.mxu0 0
        %1519 = vmatprep.mubr.bf16.mxu0 0
        %1520 = vmatmul.mubr.bf16.gmra.mrb[0].mxu0 %v1482
        %v1521 = vpop.f32.mrb[0].mxu0
        %v1522 = vadd.f32 0.0, %v1521
        %v1523 = vpop.f32.mrb[0].mxu0
        %v1524 = vpop.f32.mrb[0].mxu0
        %v1525 = vpop.f32.mrb[0].mxu0
        %1526 = vdwg.mxu0
        %1527 = vrot.lane.b32.xlu0 %v807, 64
        %v1528 = vpop.permute.xlu0 %1527
        %v1530 = vsel %vm820, %v1330, 0
        %v1533 = vsel %vm1339, %v1528, 0
        %1535 = vmatprep.subr.bf16.mxu0 0
        %1536 = vmatpush1.bf16.msra.mxu0 %v1533
        %1537 = vmatprep.subr.bf16.mxu0 0
        %1538 = vmatpush1.bf16.msra.mxu0 0
        %1539 = vmatprep.subr.bf16.mxu0 0
        %1540 = vmatpush1.bf16.msra.mxu0 0
        %1541 = vmatprep.subr.bf16.mxu0 0
        %1542 = vmatpush1.bf16.msra.mxu0 0
        %1543 = vmatprep.subr.bf16.mxu0 0
        %1544 = vmatpush1.bf16.msra.mxu0 0
        %1545 = vmatprep.subr.bf16.mxu0 0
        %1546 = vmatpush1.bf16.msra.mxu0 0
        %1547 = vmatprep.subr.bf16.mxu0 0
        %1548 = vmatpush1.bf16.msra.mxu0 0
        %1549 = vmatprep.subr.bf16.mxu0 0
        %1550 = vmatpush1.bf16.msra.mxu0 0
        %1551 = vmatprep.subr.bf16.mxu0 0
        %1552 = vmatpush1.bf16.msra.mxu0 0
        %1553 = vmatprep.subr.bf16.mxu0 0
        %1554 = vmatpush1.bf16.msra.mxu0 0
        %1555 = vmatprep.subr.bf16.mxu0 0
        %1556 = vmatpush1.bf16.msra.mxu0 0
        %1557 = vmatprep.subr.bf16.mxu0 0
        %1558 = vmatpush1.bf16.msra.mxu0 0
        %1559 = vmatprep.subr.bf16.mxu0 0
        %1560 = vmatpush1.bf16.msra.mxu0 0
        %1561 = vmatprep.subr.bf16.mxu0 0
        %1562 = vmatpush1.bf16.msra.mxu0 0
        %1563 = vmatprep.subr.bf16.mxu0 0
        %1564 = vmatpush1.bf16.msra.mxu0 0
        %1565 = vmatprep.subr.bf16.mxu0 0
        %1566 = vmatpush1.bf16.msra.mxu0 0
        %1567 = vmatprep.mubr.bf16.mxu0 0
        %1568 = vmatmul.mubr.bf16.gmra.mrb[0].mxu0 %v1530
        %v1569 = vpop.f32.mrb[0].mxu0
        %v1570 = vadd.f32 0.0, %v1569
        %v1571 = vpop.f32.mrb[0].mxu0
        %v1572 = vpop.f32.mrb[0].mxu0
        %v1573 = vpop.f32.mrb[0].mxu0
        %1574 = vdwg.mxu0
        %1575 = vrot.lane.b32.xlu0 %v808, 64
        %v1576 = vpop.permute.xlu0 %1575
        %v1578 = vsel %vm820, %v1331, 0
        %v1581 = vsel %vm1339, %v1576, 0
        %1583 = vmatprep.subr.bf16.mxu0 0
        %1584 = vmatpush1.bf16.msra.mxu0 %v1581
        %1585 = vmatprep.subr.bf16.mxu0 0
        %1586 = vmatpush1.bf16.msra.mxu0 0
        %1587 = vmatprep.subr.bf16.mxu0 0
        %1588 = vmatpush1.bf16.msra.mxu0 0
        %1589 = vmatprep.subr.bf16.mxu0 0
        %1590 = vmatpush1.bf16.msra.mxu0 0
        %1591 = vmatprep.subr.bf16.mxu0 0
        %1592 = vmatpush1.bf16.msra.mxu0 0
        %1593 = vmatprep.subr.bf16.mxu0 0
        %1594 = vmatpush1.bf16.msra.mxu0 0
        %1595 = vmatprep.subr.bf16.mxu0 0
        %1596 = vmatpush1.bf16.msra.mxu0 0
        %1597 = vmatprep.subr.bf16.mxu0 0
        %1598 = vmatpush1.bf16.msra.mxu0 0
        %1599 = vmatprep.subr.bf16.mxu0 0
        %1600 = vmatpush1.bf16.msra.mxu0 0
        %1601 = vmatprep.subr.bf16.mxu0 0
        %1602 = vmatpush1.bf16.msra.mxu0 0
        %1603 = vmatprep.subr.bf16.mxu0 0
        %1604 = vmatpush1.bf16.msra.mxu0 0
        %1605 = vmatprep.subr.bf16.mxu0 0
        %1606 = vmatpush1.bf16.msra.mxu0 0
        %1607 = vmatprep.subr.bf16.mxu0 0
        %1608 = vmatpush1.bf16.msra.mxu0 0
        %1609 = vmatprep.subr.bf16.mxu0 0
        %1610 = vmatpush1.bf16.msra.mxu0 0
        %1611 = vmatprep.subr.bf16.mxu0 0
        %1612 = vmatpush1.bf16.msra.mxu0 0
        %1613 = vmatprep.subr.bf16.mxu0 0
        %1614 = vmatpush1.bf16.msra.mxu0 0
        %1615 = vmatprep.mubr.bf16.mxu0 0
        %1616 = vmatmul.mubr.bf16.gmra.mrb[0].mxu0 %v1578
        %v1617 = vpop.f32.mrb[0].mxu0
        %v1618 = vadd.f32 0.0, %v1617
        %v1619 = vpop.f32.mrb[0].mxu0
        %v1620 = vpop.f32.mrb[0].mxu0
        %v1621 = vpop.f32.mrb[0].mxu0
        %1622 = vdwg.mxu0
        %1623 = vrot.lane.b32.xlu0 %v809, 64
        %v1624 = vpop.permute.xlu0 %1623
        %v1626 = vsel %vm820, %v1332, 0
        %v1629 = vsel %vm1339, %v1624, 0
        %1631 = vmatprep.subr.bf16.mxu0 0
        %1632 = vmatpush1.bf16.msra.mxu0 %v1629
        %1633 = vmatprep.subr.bf16.mxu0 0
        %1634 = vmatpush1.bf16.msra.mxu0 0
        %1635 = vmatprep.subr.bf16.mxu0 0
        %1636 = vmatpush1.bf16.msra.mxu0 0
        %1637 = vmatprep.subr.bf16.mxu0 0
        %1638 = vmatpush1.bf16.msra.mxu0 0
        %1639 = vmatprep.subr.bf16.mxu0 0
        %1640 = vmatpush1.bf16.msra.mxu0 0
        %1641 = vmatprep.subr.bf16.mxu0 0
        %1642 = vmatpush1.bf16.msra.mxu0 0
        %1643 = vmatprep.subr.bf16.mxu0 0
        %1644 = vmatpush1.bf16.msra.mxu0 0
        %1645 = vmatprep.subr.bf16.mxu0 0
        %1646 = vmatpush1.bf16.msra.mxu0 0
        %1647 = vmatprep.subr.bf16.mxu0 0
        %1648 = vmatpush1.bf16.msra.mxu0 0
        %1649 = vmatprep.subr.bf16.mxu0 0
        %1650 = vmatpush1.bf16.msra.mxu0 0
        %1651 = vmatprep.subr.bf16.mxu0 0
        %1652 = vmatpush1.bf16.msra.mxu0 0
        %1653 = vmatprep.subr.bf16.mxu0 0
        %1654 = vmatpush1.bf16.msra.mxu0 0
        %1655 = vmatprep.subr.bf16.mxu0 0
        %1656 = vmatpush1.bf16.msra.mxu0 0
        %1657 = vmatprep.subr.bf16.mxu0 0
        %1658 = vmatpush1.bf16.msra.mxu0 0
        %1659 = vmatprep.subr.bf16.mxu0 0
        %1660 = vmatpush1.bf16.msra.mxu0 0
        %1661 = vmatprep.subr.bf16.mxu0 0
        %1662 = vmatpush1.bf16.msra.mxu0 0
        %1663 = vmatprep.mubr.bf16.mxu0 0
        %1664 = vmatmul.mubr.bf16.gmra.mrb[0].mxu0 %v1626
        %v1665 = vpop.f32.mrb[0].mxu0
        %v1666 = vadd.f32 0.0, %v1665
        %v1667 = vpop.f32.mrb[0].mxu0
        %v1668 = vpop.f32.mrb[0].mxu0
        %v1669 = vpop.f32.mrb[0].mxu0
        %1670 = vdwg.mxu0
        %1671 = vrot.lane.b32.xlu0 %v810, 64
        %v1672 = vpop.permute.xlu0 %1671
        %v1674 = vsel %vm820, %v1333, 0
        %v1677 = vsel %vm1339, %v1672, 0
        %1679 = vmatprep.subr.bf16.mxu0 0
        %1680 = vmatpush1.bf16.msra.mxu0 %v1677
        %1681 = vmatprep.subr.bf16.mxu0 0
        %1682 = vmatpush1.bf16.msra.mxu0 0
        %1683 = vmatprep.subr.bf16.mxu0 0
        %1684 = vmatpush1.bf16.msra.mxu0 0
        %1685 = vmatprep.subr.bf16.mxu0 0
        %1686 = vmatpush1.bf16.msra.mxu0 0
        %1687 = vmatprep.subr.bf16.mxu0 0
        %1688 = vmatpush1.bf16.msra.mxu0 0
        %1689 = vmatprep.subr.bf16.mxu0 0
        %1690 = vmatpush1.bf16.msra.mxu0 0
        %1691 = vmatprep.subr.bf16.mxu0 0
        %1692 = vmatpush1.bf16.msra.mxu0 0
        %1693 = vmatprep.subr.bf16.mxu0 0
        %1694 = vmatpush1.bf16.msra.mxu0 0
        %1695 = vmatprep.subr.bf16.mxu0 0
        %1696 = vmatpush1.bf16.msra.mxu0 0
        %1697 = vmatprep.subr.bf16.mxu0 0
        %1698 = vmatpush1.bf16.msra.mxu0 0
        %1699 = vmatprep.subr.bf16.mxu0 0
        %1700 = vmatpush1.bf16.msra.mxu0 0
        %1701 = vmatprep.subr.bf16.mxu0 0
        %1702 = vmatpush1.bf16.msra.mxu0 0
        %1703 = vmatprep.subr.bf16.mxu0 0
        %1704 = vmatpush1.bf16.msra.mxu0 0
        %1705 = vmatprep.subr.bf16.mxu0 0
        %1706 = vmatpush1.bf16.msra.mxu0 0
        %1707 = vmatprep.subr.bf16.mxu0 0
        %1708 = vmatpush1.bf16.msra.mxu0 0
        %1709 = vmatprep.subr.bf16.mxu0 0
        %1710 = vmatpush1.bf16.msra.mxu0 0
        %1711 = vmatprep.mubr.bf16.mxu0 0
        %1712 = vmatmul.mubr.bf16.gmra.mrb[0].mxu0 %v1674
        %v1713 = vpop.f32.mrb[0].mxu0
        %v1714 = vadd.f32 0.0, %v1713
        %v1715 = vpop.f32.mrb[0].mxu0
        %v1716 = vpop.f32.mrb[0].mxu0
        %v1717 = vpop.f32.mrb[0].mxu0
        %1718 = vdwg.mxu0
        %1721 = vrot.lane.b32.xlu0 %v1474, 8
        %v1722 = vpop.permute.xlu0 %1721
        %1723 = vrot.lane.b32.xlu0 %v1522, 8
        %v1724 = vpop.permute.xlu0 %1723
        %1729 = vrot.lane.b32.xlu0 %v1570, 16
        %v1730 = vpop.permute.xlu0 %1729
        %1731 = vrot.lane.b32.xlu0 %v1618, 16
        %v1732 = vpop.permute.xlu0 %1731
        %1737 = vrot.lane.b32.xlu0 %v1666, 24
        %v1738 = vpop.permute.xlu0 %1737
        %1739 = vrot.lane.b32.xlu0 %v1714, 24
        %v1740 = vpop.permute.xlu0 %1739
        %v1743 = vsel %vm820, %v1378, %v1722
        %v1744 = vsel %vm820, %v1426, %v1724
        %vm1745 = vcmask 130048
        %v1746 = vsel %vm1745, %v1743, %v1730
        %v1747 = vsel %vm1745, %v1744, %v1732
        %vm1748 = vcmask 195584
        %v1749 = vsel %vm1748, %v1746, %v1738
        %v1750 = vsel %vm1748, %v1747, %v1740
        %v1751 = vpack.c.bf16 %v1750, %v1749
        %v1752 = vld [vmem:[%s537] sm:$0xf]
        %v1753 = vld [vmem:[%s537 + $0x4] sm:$0xf]
        %v1754 = vld [vmem:[%s537 + $0x8] sm:$0xf]
        %v1755 = vld [vmem:[%s537 + $0xc] sm:$0xf]
        %v1756 = vlaneseq
        %v1757 = vshrl.u32 %v1756, 7
        %v1758 = vsub.s32 0, %v1757
        %v1759 = vrot.slane %v711, %v1758
        %v1764 = vunpack.c.l.b16 %v1752
        %v1765 = vunpack.c.l.b16 %v1753
        %v1766 = vunpack.c.l.b16 %v1754
        %v1767 = vunpack.c.l.b16 %v1755
        %v1768 = vpack.c.b16 %v1765, %v1764
        %v1769 = vpack.c.b16 %v1767, %v1766
        %v1773 = vsel %vm738, %v1751, 0
        %1775 = vmatprep.subr.bf16.mxu0 0
        %1776 = vmatpush1.bf16.msra.mxu0 %v1768
        %1777 = vmatprep.subr.bf16.mxu0 0
        %1778 = vmatpush1.bf16.msra.mxu0 %v1769
        %1779 = vmatprep.subr.bf16.mxu0 0
        %1780 = vmatpush1.bf16.msra.mxu0 0
        %1781 = vmatprep.subr.bf16.mxu0 0
        %1782 = vmatpush1.bf16.msra.mxu0 0
        %1783 = vmatprep.subr.bf16.mxu0 0
        %1784 = vmatpush1.bf16.msra.mxu0 0
        %1785 = vmatprep.subr.bf16.mxu0 0
        %1786 = vmatpush1.bf16.msra.mxu0 0
        %1787 = vmatprep.subr.bf16.mxu0 0
        %1788 = vmatpush1.bf16.msra.mxu0 0
        %1789 = vmatprep.subr.bf16.mxu0 0
        %1790 = vmatpush1.bf16.msra.mxu0 0
        %1791 = vmatprep.subr.bf16.mxu0 0
        %1792 = vmatpush1.bf16.msra.mxu0 0
        %1793 = vmatprep.subr.bf16.mxu0 0
        %1794 = vmatpush1.bf16.msra.mxu0 0
        %1795 = vmatprep.subr.bf16.mxu0 0
        %1796 = vmatpush1.bf16.msra.mxu0 0
        %1797 = vmatprep.subr.bf16.mxu0 0
        %1798 = vmatpush1.bf16.msra.mxu0 0
        %1799 = vmatprep.subr.bf16.mxu0 0
        %1800 = vmatpush1.bf16.msra.mxu0 0
        %1801 = vmatprep.subr.bf16.mxu0 0
        %1802 = vmatpush1.bf16.msra.mxu0 0
        %1803 = vmatprep.subr.bf16.mxu0 0
        %1804 = vmatpush1.bf16.msra.mxu0 0
        %1805 = vmatprep.subr.bf16.mxu0 0
        %1806 = vmatpush1.bf16.msra.mxu0 0
        %1807 = vmatprep.mubr.bf16.mxu0 0
        %1808 = vmatmul.mubr.bf16.gmra.mrb[0].mxu0 %v1773
        %v1809 = vpop.f32.mrb[0].mxu0
        %v1810 = vadd.f32 %v1759, %v1809
        %v1811 = vpop.f32.mrb[0].mxu0
        %v1812 = vpop.f32.mrb[0].mxu0
        %v1813 = vadd.f32 %v1759, %v1812
        %v1814 = vpop.f32.mrb[0].mxu0
        %1815 = vdwg.mxu0
        %v1816 = vadd.f32 %v1810, %v707
        %v1817 = vadd.f32 %v1813, %v708
        %v1818 = vsel %vm738, %v1816, 0.0
        %1819 = vadd.xlane.f32.xlu0 %v1818
        %v1820 = vpop.xlane.xlu0 %1819
        %v1821 = vsel %vm738, %v1817, 0.0
        %1822 = vadd.xlane.f32.xlu0 %v1821
        %v1823 = vpop.xlane.xlu0 %1822
        %v1824 = vrcp.pop 32.0
        %v1825 = vmul.f32 %v1820, %v1824
        %v1826 = vmul.f32 %v1823, %v1824
        %v1827 = vsub.f32 %v1816, %v1825
        %v1828 = vsub.f32 %v1817, %v1826
        %v1829 = vmul.f32 %v1827, %v1827
        %v1830 = vmul.f32 %v1828, %v1828
        %v1831 = vsel %vm738, %v1829, 0.0
        %1832 = vadd.xlane.f32.xlu0 %v1831
        %v1833 = vpop.xlane.xlu0 %1832
        %v1834 = vsel %vm738, %v1830, 0.0
        %1835 = vadd.xlane.f32.xlu0 %v1834
        %v1836 = vpop.xlane.xlu0 %1835
        %v1837 = vmul.f32 %v1833, %v1824
        %v1838 = vmul.f32 %v1836, %v1824
        %v1839 = vadd.f32 %v1837, 1e-12
        %v1840 = vadd.f32 %v1838, 1e-12
        %v1841 = vrsqrt.pop %v1839
        %v1842 = vrsqrt.pop %v1840
        %v1843 = vmul.f32 %v1827, %v1841
        %v1844 = vmul.f32 %v1828, %v1842
        %v1845 = vlaneseq
        %v1846 = vshrl.u32 %v1845, 7
        %v1847 = vsub.s32 0, %v1846
        %v1848 = vrot.slane %v712, %v1847
        %v1849 = vmul.f32 %v1843, %v1848
        %v1850 = vmul.f32 %v1844, %v1848
        %v1851 = vlaneseq
        %v1852 = vshrl.u32 %v1851, 7
        %v1853 = vsub.s32 0, %v1852
        %v1854 = vrot.slane %v713, %v1853
        %v1855 = vadd.f32 %v1849, %v1854
        %v1856 = vadd.f32 %v1850, %v1854
        %v1857 = vpack.c.bf16 %v1856, %v1855
        %v1858 = vld [vmem:[%s542] sm:$0xf]
        %v1859 = vld [vmem:[%s542 + $0x4] sm:$0xf]
        %v1860 = vld [vmem:[%s542 + $0x8] sm:$0xf]
        %v1861 = vld [vmem:[%s542 + $0xc] sm:$0xf]
        %v1862 = vlaneseq
        %v1863 = vshrl.u32 %v1862, 7
        %v1864 = vsub.s32 0, %v1863
        %v1865 = vrot.slane %v714, %v1864
        %v1870 = vunpack.c.l.b16 %v1858
        %v1871 = vunpack.c.l.b16 %v1859
        %v1872 = vunpack.c.l.b16 %v1860
        %v1873 = vunpack.c.l.b16 %v1861
        %v1874 = vpack.c.b16 %v1871, %v1870
        %v1875 = vpack.c.b16 %v1873, %v1872
        %v1879 = vsel %vm738, %v1857, 0
        %1881 = vmatprep.subr.bf16.mxu0 0
        %1882 = vmatpush1.bf16.msra.mxu0 %v1874
        %1883 = vmatprep.subr.bf16.mxu0 0
        %1884 = vmatpush1.bf16.msra.mxu0 %v1875
        %1885 = vmatprep.subr.bf16.mxu0 0
        %1886 = vmatpush1.bf16.msra.mxu0 0
        %1887 = vmatprep.subr.bf16.mxu0 0
        %1888 = vmatpush1.bf16.msra.mxu0 0
        %1889 = vmatprep.subr.bf16.mxu0 0
        %1890 = vmatpush1.bf16.msra.mxu0 0
        %1891 = vmatprep.subr.bf16.mxu0 0
        %1892 = vmatpush1.bf16.msra.mxu0 0
        %1893 = vmatprep.subr.bf16.mxu0 0
        %1894 = vmatpush1.bf16.msra.mxu0 0
        %1895 = vmatprep.subr.bf16.mxu0 0
        %1896 = vmatpush1.bf16.msra.mxu0 0
        %1897 = vmatprep.subr.bf16.mxu0 0
        %1898 = vmatpush1.bf16.msra.mxu0 0
        %1899 = vmatprep.subr.bf16.mxu0 0
        %1900 = vmatpush1.bf16.msra.mxu0 0
        %1901 = vmatprep.subr.bf16.mxu0 0
        %1902 = vmatpush1.bf16.msra.mxu0 0
        %1903 = vmatprep.subr.bf16.mxu0 0
        %1904 = vmatpush1.bf16.msra.mxu0 0
        %1905 = vmatprep.subr.bf16.mxu0 0
        %1906 = vmatpush1.bf16.msra.mxu0 0
        %1907 = vmatprep.subr.bf16.mxu0 0
        %1908 = vmatpush1.bf16.msra.mxu0 0
        %1909 = vmatprep.subr.bf16.mxu0 0
        %1910 = vmatpush1.bf16.msra.mxu0 0
        %1911 = vmatprep.subr.bf16.mxu0 0
        %1912 = vmatpush1.bf16.msra.mxu0 0
        %1913 = vmatprep.mubr.bf16.mxu0 0
        %1914 = vmatmul.mubr.bf16.gmra.mrb[0].mxu0 %v1879
        %v1915 = vpop.f32.mrb[0].mxu0
        %v1916 = vadd.f32 %v1865, %v1915
        %v1917 = vpop.f32.mrb[0].mxu0
        %v1918 = vpop.f32.mrb[0].mxu0
        %v1919 = vadd.f32 %v1865, %v1918
        %v1920 = vpop.f32.mrb[0].mxu0
        %1921 = vdwg.mxu0
        %v1922 = vmul.f32 %v1916, 0.5
        %v1923 = vmul.f32 %v1919, 0.5
        %v1924 = vmul.f32 %v1916, 0.044715
        %v1925 = vmul.f32 %v1919, 0.044715
        %v1926 = vmul.f32 %v1924, %v1916
        %v1927 = vmul.f32 %v1925, %v1919
        %v1928 = vmul.f32 %v1926, %v1916
        %v1929 = vmul.f32 %v1927, %v1919
        %v1930 = vadd.f32 %v1916, %v1928
        %v1931 = vadd.f32 %v1919, %v1929
        %v1932 = vmul.f32 %v1930, 0.7978846
        %v1933 = vmul.f32 %v1931, 0.7978846
        %v1934 = vtanh.pop %v1932
        %v1935 = vtanh.pop %v1933
        %v1936 = vadd.f32 %v1934, 1.0
        %v1937 = vadd.f32 %v1935, 1.0
        %v1938 = vmul.f32 %v1922, %v1936
        %v1939 = vmul.f32 %v1923, %v1937
        %v1940 = vpack.c.bf16 %v1939, %v1938
        %v1941 = vld [vmem:[%s547] sm:$0xf]
        %v1942 = vld [vmem:[%s547 + $0x4] sm:$0xf]
        %v1943 = vld [vmem:[%s547 + $0x8] sm:$0xf]
        %v1944 = vld [vmem:[%s547 + $0xc] sm:$0xf]
        %v1945 = vld [vmem:[%s547 + $0x10] sm:$0xf]
        %v1946 = vld [vmem:[%s547 + $0x14] sm:$0xf]
        %v1947 = vld [vmem:[%s547 + $0x18] sm:$0xf]
        %v1948 = vld [vmem:[%s547 + $0x1c] sm:$0xf]
        %v1949 = vlaneseq
        %v1950 = vshrl.u32 %v1949, 7
        %v1951 = vsub.s32 0, %v1950
        %v1952 = vrot.slane %v715, %v1951
        %v1961 = vunpack.c.l.b16 %v1941
        %v1962 = vunpack.c.l.b16 %v1942
        %v1963 = vunpack.c.l.b16 %v1943
        %v1964 = vunpack.c.l.b16 %v1944
        %v1965 = vunpack.c.l.b16 %v1945
        %v1966 = vunpack.c.l.b16 %v1946
        %v1967 = vunpack.c.l.b16 %v1947
        %v1968 = vunpack.c.l.b16 %v1948
        %v1969 = vpack.c.b16 %v1962, %v1961
        %v1970 = vpack.c.b16 %v1964, %v1963
        %v1971 = vpack.c.b16 %v1966, %v1965
        %v1972 = vpack.c.b16 %v1968, %v1967
        %vm1977 = vcmask 523264
        %v1979 = vsel %vm1977, %v1940, 0
        %1981 = vmatprep.subr.bf16.mxu0 0
        %1982 = vmatpush1.bf16.msra.mxu0 %v1969
        %1983 = vmatprep.subr.bf16.mxu0 0
        %1984 = vmatpush1.bf16.msra.mxu0 %v1970
        %1985 = vmatprep.subr.bf16.mxu0 0
        %1986 = vmatpush1.bf16.msra.mxu0 %v1971
        %1987 = vmatprep.subr.bf16.mxu0 0
        %1988 = vmatpush1.bf16.msra.mxu0 %v1972
        %1989 = vmatprep.subr.bf16.mxu0 0
        %1990 = vmatpush1.bf16.msra.mxu0 0
        %1991 = vmatprep.subr.bf16.mxu0 0
        %1992 = vmatpush1.bf16.msra.mxu0 0
        %1993 = vmatprep.subr.bf16.mxu0 0
        %1994 = vmatpush1.bf16.msra.mxu0 0
        %1995 = vmatprep.subr.bf16.mxu0 0
        %1996 = vmatpush1.bf16.msra.mxu0 0
        %1997 = vmatprep.subr.bf16.mxu0 0
        %1998 = vmatpush1.bf16.msra.mxu0 0
        %1999 = vmatprep.subr.bf16.mxu0 0
        %2000 = vmatpush1.bf16.msra.mxu0 0
        %2001 = vmatprep.subr.bf16.mxu0 0
        %2002 = vmatpush1.bf16.msra.mxu0 0
        %2003 = vmatprep.subr.bf16.mxu0 0
        %2004 = vmatpush1.bf16.msra.mxu0 0
        %2005 = vmatprep.subr.bf16.mxu0 0
        %2006 = vmatpush1.bf16.msra.mxu0 0
        %2007 = vmatprep.subr.bf16.mxu0 0
        %2008 = vmatpush1.bf16.msra.mxu0 0
        %2009 = vmatprep.subr.bf16.mxu0 0
        %2010 = vmatpush1.bf16.msra.mxu0 0
        %2011 = vmatprep.subr.bf16.mxu0 0
        %2012 = vmatpush1.bf16.msra.mxu0 0
        %2013 = vmatprep.mubr.bf16.mxu0 0
        %2014 = vmatmul.mubr.bf16.gmra.mrb[0].mxu0 %v1979
        %v2015 = vpop.f32.mrb[0].mxu0
        %v2016 = vadd.f32 %v1952, %v2015
        %v2017 = vpop.f32.mrb[0].mxu0
        %v2018 = vpop.f32.mrb[0].mxu0
        %v2019 = vadd.f32 %v1952, %v2018
        %v2020 = vpop.f32.mrb[0].mxu0
        %2021 = vdwg.mxu0
        %v2022 = vadd.f32 %v2016, %v1855
        %v2023 = vadd.f32 %v2019, %v1856
        %v2024 = vsel %vm738, %v2022, 0.0
        %2025 = vadd.xlane.f32.xlu0 %v2024
        %v2026 = vpop.xlane.xlu0 %2025
        %v2027 = vsel %vm738, %v2023, 0.0
        %2028 = vadd.xlane.f32.xlu0 %v2027
        %v2029 = vpop.xlane.xlu0 %2028
        %v2030 = vmul.f32 %v2026, %v1824
        %v2031 = vmul.f32 %v2029, %v1824
        %v2032 = vsub.f32 %v2022, %v2030
        %v2033 = vsub.f32 %v2023, %v2031
        %v2034 = vmul.f32 %v2032, %v2032
        %v2035 = vmul.f32 %v2033, %v2033
        %v2036 = vsel %vm738, %v2034, 0.0
        %2037 = vadd.xlane.f32.xlu0 %v2036
        %v2038 = vpop.xlane.xlu0 %2037
        %v2039 = vsel %vm738, %v2035, 0.0
        %2040 = vadd.xlane.f32.xlu0 %v2039
        %v2041 = vpop.xlane.xlu0 %2040
        %v2042 = vmul.f32 %v2038, %v1824
        %v2043 = vmul.f32 %v2041, %v1824
        %v2044 = vadd.f32 %v2042, 1e-12
        %v2045 = vadd.f32 %v2043, 1e-12
        %v2046 = vrsqrt.pop %v2044
        %v2047 = vrsqrt.pop %v2045
        %v2048 = vmul.f32 %v2032, %v2046
        %v2049 = vmul.f32 %v2033, %v2047
        %v2050 = vlaneseq
        %v2051 = vshrl.u32 %v2050, 7
        %v2052 = vsub.s32 0, %v2051
        %v2053 = vrot.slane %v716, %v2052
        %v2054 = vmul.f32 %v2048, %v2053
        %v2055 = vmul.f32 %v2049, %v2053
        %v2056 = vlaneseq
        %v2057 = vshrl.u32 %v2056, 7
        %v2058 = vsub.s32 0, %v2057
        %v2059 = vrot.slane %v717, %v2058
        %v2060 = vadd.f32 %v2054, %v2059
        %v2061 = vadd.f32 %v2055, %v2059
        %2062 = vst.msk [vmem:[#allocation2] sm:$0xff] %vm738, %v2060
        %2063 = vst.msk [vmem:[#allocation2 + $0x8] sm:$0xff] %vm738, %v2061
        %p2064 = scmp.eq.s32.totalorder %s26, 1
        // Predicated region
        $region89: #{bert_classifier_forward.1} parent=71 // pred_check
          %p2065 = pneg %p2064
        $region90: #{bert_classifier_forward.1} parent=71 // pred_check_branch
          %2067 = sbr.rel (%p2065) target = $region92
        $region91: #{bert_classifier_forward.1} parent=71 // pred_region
          %v2068 = vlaneseq
          %v2069 = vand.u32 %v2068, 127
          %v2070 = vlaneseq
          %v2071 = vshrl.u32 %v2070, 7
          %v2072 = vmul.u32 %v2071, 8
          %vm2073 = vcmp.eq.s32.totalorder %v2069, %v2072
          %v2074 = vsel %vm2073, 1, 0
          %v2075 = vcvt.s32.f32 %v2074
          %v2077 = vsel %vm1745, %v2075, 0
          %2079 = vmatprep.subr.mxu0 0.0
          %2080 = vmatpush1.msra.mxu0 %v2060
          %2081 = vmatprep.subr.mxu0 0.0
          %2082 = vmatpush1.msra.mxu0 %v2061
          %2083 = vmatprep.subr.mxu0 0.0
          %2084 = vmatpush1.msra.mxu0 0.0
          %2085 = vmatprep.subr.mxu0 0.0
          %2086 = vmatpush1.msra.mxu0 0.0
          %2087 = vmatprep.subr.mxu0 0.0
          %2088 = vmatpush1.msra.mxu0 0.0
          %2089 = vmatprep.subr.mxu0 0.0
          %2090 = vmatpush1.msra.mxu0 0.0
          %2091 = vmatprep.subr.mxu0 0.0
          %2092 = vmatpush1.msra.mxu0 0.0
          %2093 = vmatprep.subr.mxu0 0.0
          %2094 = vmatpush1.msra.mxu0 0.0
          %2095 = vmatprep.subr.mxu0 0.0
          %2096 = vmatpush1.msra.mxu0 0.0
          %2097 = vmatprep.subr.mxu0 0.0
          %2098 = vmatpush1.msra.mxu0 0.0
          %2099 = vmatprep.subr.mxu0 0.0
          %2100 = vmatpush1.msra.mxu0 0.0
          %2101 = vmatprep.subr.mxu0 0.0
          %2102 = vmatpush1.msra.mxu0 0.0
          %2103 = vmatprep.subr.mxu0 0.0
          %2104 = vmatpush1.msra.mxu0 0.0
          %2105 = vmatprep.subr.mxu0 0.0
          %2106 = vmatpush1.msra.mxu0 0.0
          %2107 = vmatprep.subr.mxu0 0.0
          %2108 = vmatpush1.msra.mxu0 0.0
          %2109 = vmatprep.subr.mxu0 0.0
          %2110 = vmatpush1.msra.mxu0 0.0
          %2111 = vmatprep.subr.mxu0 0.0
          %2112 = vmatpush1.msra.mxu0 0.0
          %2113 = vmatprep.subr.mxu0 0.0
          %2114 = vmatpush1.msra.mxu0 0.0
          %2115 = vmatprep.subr.mxu0 0.0
          %2116 = vmatpush1.msra.mxu0 0.0
          %2117 = vmatprep.subr.mxu0 0.0
          %2118 = vmatpush1.msra.mxu0 0.0
          %2119 = vmatprep.subr.mxu0 0.0
          %2120 = vmatpush1.msra.mxu0 0.0
          %2121 = vmatprep.subr.mxu0 0.0
          %2122 = vmatpush1.msra.mxu0 0.0
          %2123 = vmatprep.subr.mxu0 0.0
          %2124 = vmatpush1.msra.mxu0 0.0
          %2125 = vmatprep.subr.mxu0 0.0
          %2126 = vmatpush1.msra.mxu0 0.0
          %2127 = vmatprep.subr.mxu0 0.0
          %2128 = vmatpush1.msra.mxu0 0.0
          %2129 = vmatprep.subr.mxu0 0.0
          %2130 = vmatpush1.msra.mxu0 0.0
          %2131 = vmatprep.subr.mxu0 0.0
          %2132 = vmatpush1.msra.mxu0 0.0
          %2133 = vmatprep.subr.mxu0 0.0
          %2134 = vmatpush1.msra.mxu0 0.0
          %2135 = vmatprep.subr.mxu0 0.0
          %2136 = vmatpush1.msra.mxu0 0.0
          %2137 = vmatprep.subr.mxu0 0.0
          %2138 = vmatpush1.msra.mxu0 0.0
          %2139 = vmatprep.subr.mxu0 0.0
          %2140 = vmatpush1.msra.mxu0 0.0
          %2141 = vmatprep.subr.mxu0 0.0
          %2142 = vmatpush1.msra.mxu0 0.0
          %2143 = vmatprep.mubr.f32.mxu0 0.0
          %2144 = vmatmul.mubr.f32.gmra.mrb[0].mxu0 %v2077
          %v2145 = vpop.f32.mrb[0].mxu0
          %v2146 = vadd.f32 0.0, %v2145
          %v2147 = vpop.f32.mrb[0].mxu0
          %2148 = vdwg.mxu0
          %v2149 = vpack.c.bf16 %v2146, %v2146
          %v2150 = vld [vmem:[#allocation5] sm:$0xf]
          %v2151 = vld [vmem:[#allocation5 + $0x4] sm:$0xf]
          %v2152 = vld [vmem:[#allocation5 + $0x8] sm:$0xf]
          %v2153 = vld [vmem:[#allocation5 + $0xc] sm:$0xf]
          %v2154 = vld [vmem:[%s7] sm:$0x1]
          %v2155 = vlaneseq
          %v2156 = vshrl.u32 %v2155, 7
          %v2157 = vsub.s32 0, %v2156
          %v2158 = vrot.slane %v2154, %v2157
          %v2163 = vunpack.c.l.b16 %v2150
          %v2164 = vunpack.c.l.b16 %v2151
          %v2165 = vunpack.c.l.b16 %v2152
          %v2166 = vunpack.c.l.b16 %v2153
          %v2167 = vpack.c.b16 %v2164, %v2163
          %v2168 = vpack.c.b16 %v2166, %v2165
          %v2172 = vsel %vm738, %v2149, 0
          %2174 = vmatprep.subr.bf16.mxu0 0
          %2175 = vmatpush1.bf16.msra.mxu0 %v2167
          %2176 = vmatprep.subr.bf16.mxu0 0
          %2177 = vmatpush1.bf16.msra.mxu0 %v2168
          %2178 = vmatprep.subr.bf16.mxu0 0
          %2179 = vmatpush1.bf16.msra.mxu0 0
          %2180 = vmatprep.subr.bf16.mxu0 0
          %2181 = vmatpush1.bf16.msra.mxu0 0
          %2182 = vmatprep.subr.bf16.mxu0 0
          %2183 = vmatpush1.bf16.msra.mxu0 0
          %2184 = vmatprep.subr.bf16.mxu0 0
          %2185 = vmatpush1.bf16.msra.mxu0 0
          %2186 = vmatprep.subr.bf16.mxu0 0
          %2187 = vmatpush1.bf16.msra.mxu0 0
          %2188 = vmatprep.subr.bf16.mxu0 0
          %2189 = vmatpush1.bf16.msra.mxu0 0
          %2190 = vmatprep.subr.bf16.mxu0 0
          %2191 = vmatpush1.bf16.msra.mxu0 0
          %2192 = vmatprep.subr.bf16.mxu0 0
          %2193 = vmatpush1.bf16.msra.mxu0 0
          %2194 = vmatprep.subr.bf16.mxu0 0
          %2195 = vmatpush1.bf16.msra.mxu0 0
          %2196 = vmatprep.subr.bf16.mxu0 0
          %2197 = vmatpush1.bf16.msra.mxu0 0
          %2198 = vmatprep.subr.bf16.mxu0 0
          %2199 = vmatpush1.bf16.msra.mxu0 0
          %2200 = vmatprep.subr.bf16.mxu0 0
          %2201 = vmatpush1.bf16.msra.mxu0 0
          %2202 = vmatprep.subr.bf16.mxu0 0
          %2203 = vmatpush1.bf16.msra.mxu0 0
          %2204 = vmatprep.subr.bf16.mxu0 0
          %2205 = vmatpush1.bf16.msra.mxu0 0
          %2206 = vmatprep.mubr.bf16.mxu0 0
          %2207 = vmatmul.mubr.bf16.gmra.mrb[0].mxu0 %v2172
          %v2208 = vpop.f32.mrb[0].mxu0
          %v2209 = vadd.f32 %v2158, %v2208
          %v2210 = vpop.f32.mrb[0].mxu0
          %v2211 = vpop.f32.mrb[0].mxu0
          %v2212 = vpop.f32.mrb[0].mxu0
          %2213 = vdwg.mxu0
          %v2214 = vpack.c.bf16 %v2209, %v2209
          %v2215 = vld [vmem:[%s6] sm:$0xf]
          %v2216 = vld [vmem:[%s6 + $0x4] sm:$0xf]
          %v2217 = vld [vmem:[%s6 + $0x8] sm:$0xf]
          %v2218 = vld [vmem:[%s6 + $0xc] sm:$0xf]
          %v2219 = vld [vmem:[%s6 + $0x10] sm:$0xf]
          %v2220 = vld [vmem:[%s6 + $0x14] sm:$0xf]
          %v2221 = vld [vmem:[%s6 + $0x18] sm:$0xf]
          %v2222 = vld [vmem:[%s6 + $0x1c] sm:$0xf]
          %v2223 = vld [vmem:[%s6 + $0x20] sm:$0xf]
          %v2224 = vld [vmem:[%s6 + $0x24] sm:$0xf]
          %v2225 = vld [vmem:[%s6 + $0x28] sm:$0xf]
          %v2226 = vld [vmem:[%s6 + $0x2c] sm:$0xf]
          %v2227 = vld [vmem:[%s7 + $0x1] sm:$0x1]
          %v2228 = vlaneseq
          %v2229 = vshrl.u32 %v2228, 7
          %v2230 = vsub.s32 0, %v2229
          %v2231 = vrot.slane %v2227, %v2230
          %v2244 = vunpack.c.l.b16 %v2215
          %v2245 = vunpack.c.l.b16 %v2216
          %v2246 = vunpack.c.l.b16 %v2217
          %v2247 = vunpack.c.l.b16 %v2218
          %v2248 = vunpack.c.l.b16 %v2219
          %v2249 = vunpack.c.l.b16 %v2220
          %v2250 = vunpack.c.l.b16 %v2221
          %v2251 = vunpack.c.l.b16 %v2222
          %v2252 = vunpack.c.l.b16 %v2223
          %v2253 = vunpack.c.l.b16 %v2224
          %v2254 = vunpack.c.l.b16 %v2225
          %v2255 = vunpack.c.l.b16 %v2226
          %v2256 = vpack.c.b16 %v2245, %v2244
          %v2257 = vpack.c.b16 %v2247, %v2246
          %v2258 = vpack.c.b16 %v2249, %v2248
          %v2259 = vpack.c.b16 %v2251, %v2250
          %v2260 = vpack.c.b16 %v2253, %v2252
          %v2261 = vpack.c.b16 %v2255, %v2254
          %vm2268 = vcmask 785408
          %v2270 = vsel %vm2268, %v2214, 0
          %2272 = vmatprep.subr.bf16.mxu0 0
          %2273 = vmatpush1.bf16.msra.mxu0 %v2256
          %2274 = vmatprep.subr.bf16.mxu0 0
          %2275 = vmatpush1.bf16.msra.mxu0 %v2257
          %2276 = vmatprep.subr.bf16.mxu0 0
          %2277 = vmatpush1.bf16.msra.mxu0 %v2258
          %2278 = vmatprep.subr.bf16.mxu0 0
          %2279 = vmatpush1.bf16.msra.mxu0 %v2259
          %2280 = vmatprep.subr.bf16.mxu0 0
          %2281 = vmatpush1.bf16.msra.mxu0 %v2260
          %2282 = vmatprep.subr.bf16.mxu0 0
          %2283 = vmatpush1.bf16.msra.mxu0 %v2261
          %2284 = vmatprep.subr.bf16.mxu0 0
          %2285 = vmatpush1.bf16.msra.mxu0 0
          %2286 = vmatprep.subr.bf16.mxu0 0
          %2287 = vmatpush1.bf16.msra.mxu0 0
          %2288 = vmatprep.subr.bf16.mxu0 0
          %2289 = vmatpush1.bf16.msra.mxu0 0
          %2290 = vmatprep.subr.bf16.mxu0 0
          %2291 = vmatpush1.bf16.msra.mxu0 0
          %2292 = vmatprep.subr.bf16.mxu0 0
          %2293 = vmatpush1.bf16.msra.mxu0 0
          %2294 = vmatprep.subr.bf16.mxu0 0
          %2295 = vmatpush1.bf16.msra.mxu0 0
          %2296 = vmatprep.subr.bf16.mxu0 0
          %2297 = vmatpush1.bf16.msra.mxu0 0
          %2298 = vmatprep.subr.bf16.mxu0 0
          %2299 = vmatpush1.bf16.msra.mxu0 0
          %2300 = vmatprep.subr.bf16.mxu0 0
          %2301 = vmatpush1.bf16.msra.mxu0 0
          %2302 = vmatprep.subr.bf16.mxu0 0
          %2303 = vmatpush1.bf16.msra.mxu0 0
          %2304 = vmatprep.mubr.bf16.mxu0 0
          %2305 = vmatmul.mubr.bf16.gmra.mrb[0].mxu0 %v2270
          %v2306 = vpop.f32.mrb[0].mxu0
          %v2307 = vadd.f32 %v2231, %v2306
          %v2308 = vpop.f32.mrb[0].mxu0
          %v2309 = vpop.f32.mrb[0].mxu0
          %v2310 = vpop.f32.mrb[0].mxu0
          %2311 = vdwg.mxu0
          %2312 = vst [vmem:[%s13] sm:$0x3] %v2307
        $region92: #{bert_classifier_forward.1} parent=71 // pred_fallthru
          _
        // Predicated region
        $region93: #{bert_classifier_forward.1} parent=71 // pred_check
          %p2313 = pneg %p337
        $region94: #{bert_classifier_forward.1} parent=71 // pred_check_branch
          %2315 = sbr.rel (%p2313) target = $region96
        $region95: #{bert_classifier_forward.1} parent=71 // pred_region
          _
        $region96: #{bert_classifier_forward.1} parent=71 // pred_fallthru
          _
        // Predicated region
        $region97: #{bert_classifier_forward.1} parent=71 // pred_check
          %p2316 = pneg %p337
        $region98: #{bert_classifier_forward.1} parent=71 // pred_check_branch
          %2318 = sbr.rel (%p2316) target = $region100
        $region99: #{bert_classifier_forward.1} parent=71 // pred_region
          _
        $region100: #{bert_classifier_forward.1} parent=71 // pred_fallthru
          _
      $region72: #{bert_classifier_forward.1} parent=5 // pred_fallthru
        _
      %p2319 = scmp.le.s32.totalorder 2, %s21
      // Predicated region
      $region101: #{bert_classifier_forward.1} parent=5 // pred_check
        %p2320 = pneg %p2319
      $region102: #{bert_classifier_forward.1} parent=5 // pred_check_branch
        %2322 = sbr.rel (%p2320) target = $region104
      $region103: #{bert_classifier_forward.1} parent=5 // pred_region
        %s2323 = ssub.s32 %s21, 2
      $region104: #{bert_classifier_forward.1} parent=5 // pred_fallthru
        _
    $region6: #{bert_classifier_forward.1} parent=1 // loop_footer
      %s25 = sadd.s32 1, %s21
    $region7: #{bert_classifier_forward.1} parent=1 // loop_footer_branch
      %20 = sbr.rel target = $region3
    $region8: #{bert_classifier_forward.1} parent=1 // loop_exit
      _
    %2324 = vsyncpa [#allocation4], 1
    %s2325 = scalar_lea.sflag [#allocation4], 1
    %2326 = vsyncpa %s2325, 1
    %2327 = vsyncpa [#allocation6], 1

</llo_original>
